<compile_context>
chip_gen: v6e
topology: v6e:2x2x1
jax: 0.10.0
libtpu: 0.0.40
codegen_flags: <defaults>
</compile_context>

<pallas_src>
import jax
import jax.numpy as jnp
from jax.experimental import pallas as pl
from jax.experimental.pallas import tpu as pltpu

NEG_SLOPE = 0.01  # nn.LeakyReLU default


def _leaky_relu(x):
    return jnp.where(x > 0, x, NEG_SLOPE * x)


def _round_up(x, m):
    return ((x + m - 1) // m) * m


def reward_ensemble_kernel(x_ref, w1_ref, b1_ref, w2_ref, b2_ref,
                           w3_ref, b3_ref, w4_ref, b4_ref, o_ref):
    """One row tile, all ensemble members.

    x_ref : (TM, D)        fused concat(obs, act) rows (compute dtype)
    w1_ref: (D, E*H1)      layer-1 weights, members stacked on the N axis
    b1_ref: (1, E*H1)      layer-1 biases (f32)
    w2_ref: (E, H1, H2)    per-member layer-2 weights (VMEM resident)
    b2_ref: (E, 1, H2)
    w3_ref: (E, H2, H3)
    b3_ref: (E, 1, H3)
    w4_ref: (E, 1, H3)     final-layer weights, pre-transposed (lane-major)
    b4_ref: (E,) in SMEM   final-layer scalar biases
    o_ref : (E, TM)        lane-dense output rows (f32)
    """
    E = o_ref.shape[0]
    H1 = w2_ref.shape[1]

    # Layer 1 for ALL members at once: (TM, D) @ (D, E*H1), f32 accumulation.
    h_all = jnp.dot(x_ref[...], w1_ref[...],
                    preferred_element_type=jnp.float32) + b1_ref[...]
    h_all = _leaky_relu(h_all)
    # TODO(synk): nn.Dropout is identity in eval mode; training-mode dropout not modeled.

    # Per-member layers 2..4, unrolled (E is small, e.g. 3).  Weights are
    # VMEM-resident, so nothing re-streams per row tile.
    for e in range(E):
        h = h_all[:, e * H1:(e + 1) * H1]           # static, lane-aligned slice

        h = jnp.dot(h.astype(w2_ref.dtype), w2_ref[e],
                    preferred_element_type=jnp.float32) + b2_ref[e]
        h = _leaky_relu(h)

        h = jnp.dot(h.astype(w3_ref.dtype), w3_ref[e],
                    preferred_element_type=jnp.float32) + b3_ref[e]
        h = _leaky_relu(h)

        # Layer 4: output width 1 -> VPU multiply + lane (XLU) reduction
        # instead of a 1-useful-column MXU pass.  The sublane->lane relayout
        # feeding the lane-dense output row runs on the XLU, off the MXU
        # critical path (per member it is only TM values).
        r = jnp.sum(h * w4_ref[e], axis=-1) + b4_ref[e]      # (TM,)
        o_ref[e, :] = r.astype(o_ref.dtype)


def reward_ensemble_forward(obs, act, params, *, tile_rows=2048,
                            compute_dtype=jnp.bfloat16):
    """obs: (B, F, obs_dim), act: (B, F, act_dim) -> rewards (B, F, E).

    compute_dtype sets the MXU operand dtype.  bf16 is the production default
    (MXU fast path + half the operand DMA bytes); accumulation, bias-add and
    LeakyReLU are always f32.  Pass jnp.float32 for bit-tight comparisons.
    """
    B, F, obs_dim = obs.shape
    act_dim = act.shape[-1]
    M = B * F

    w1, b1, w2, b2, w3, b3, w4, b4 = params
    E, D, H1 = w1.shape
    H2 = w2.shape[2]
    H3 = w3.shape[2]
    assert D == obs_dim + act_dim

    # --- row tiling --------------------------------------------------------
    # TM is a multiple of 128 (lane-dense stores).  Keep >= 2 row tiles when M
    # allows so both v7x TensorCores get work on the "parallel" m axis.
    M128 = _round_up(M, 128)
    TM = min(_round_up(tile_rows, 128), M128)
    if M128 // TM < 2 and M128 >= 256:
        TM = _round_up(M128 // 2, 128)
    M_pad = _round_up(M, TM)
    num_m_tiles = M_pad // TM

    # --- operands ----------------------------------------------------------
    # Fused concat(obs, act): one (M, D) HBM array -> one DMA stream and a
    # single K=D matmul in layer 1 (no duplicate lane-padded input tiles).
    x2d = jnp.concatenate(
        [obs.reshape(M, obs_dim), act.reshape(M, act_dim)], axis=-1
    ).astype(compute_dtype)
    if M_pad != M:
        x2d = jnp.pad(x2d, ((0, M_pad - M), (0, 0)))

    # Layer-1 weights for all members stacked along the output (lane) axis.
    w1_all = jnp.transpose(w1, (1, 0, 2)).reshape(D, E * H1).astype(compute_dtype)
    b1_all = b1.reshape(1, E * H1).astype(jnp.float32)

    w2c = w2.astype(compute_dtype)                               # (E, H1, H2)
    w3c = w3.astype(compute_dtype)                               # (E, H2, H3)
    # Final-layer weights pre-transposed to (E, 1, H3): values on the lane axis.
    w4r = jnp.transpose(w4, (0, 2, 1)).astype(compute_dtype)

    b2r = b2.reshape(E, 1, H2).astype(jnp.float32)
    b3r = b3.reshape(E, 1, H3).astype(jnp.float32)
    b4r = b4.reshape(E).astype(jnp.float32)                      # scalars -> SMEM

    out = pl.pallas_call(
        reward_ensemble_kernel,
        out_shape=jax.ShapeDtypeStruct((E, M_pad), jnp.float32),
        grid_spec=pltpu.PrefetchScalarGridSpec(
            num_scalar_prefetch=0,
            grid=(num_m_tiles,),
            in_specs=[
                pl.BlockSpec((TM, D), lambda m: (m, 0)),          # fused x rows
                # Weights/biases: constant block index -> fetched once and
                # VMEM-resident across all row tiles (per core on v7x).
                pl.BlockSpec((D, E * H1), lambda m: (0, 0)),       # W1 (all members)
                pl.BlockSpec((1, E * H1), lambda m: (0, 0)),       # b1 (all members)
                pl.BlockSpec((E, H1, H2), lambda m: (0, 0, 0)),    # W2
                pl.BlockSpec((E, 1, H2), lambda m: (0, 0, 0)),     # b2
                pl.BlockSpec((E, H2, H3), lambda m: (0, 0, 0)),    # W3
                pl.BlockSpec((E, 1, H3), lambda m: (0, 0, 0)),     # b3
                pl.BlockSpec((E, 1, H3), lambda m: (0, 0, 0)),     # W4 (transposed)
                pl.BlockSpec(memory_space=pltpu.MemorySpace.SMEM), # b4 scalars
            ],
            # (E, TM) block: sublane dim E equals the full dim (legal), lane
            # dim TM is a multiple of 128 -> full-width vst + one dense
            # write-back DMA per row tile.
            out_specs=pl.BlockSpec((E, TM), lambda m: (0, m)),
        ),
        compiler_params=pltpu.CompilerParams(
            dimension_semantics=("parallel",),
            vmem_limit_bytes=32 * 1024 * 1024,
        ),
    )(x2d, w1_all, b1_all, w2c, b2r, w3c, b3r, w4r, b4r)

    out = out[:, :M]                                    # drop row padding
    return jnp.transpose(out, (1, 0)).reshape(B, F, E)


def init_params(key, obs_dim, act_dim, hidden_dims, ensemble_size):
    """Deterministic synthetic parameter init (weights stored as (in, out))."""
    D = obs_dim + act_dim
    dims = [D] + list(hidden_dims) + [1]
    keys = jax.random.split(key, 2 * (len(dims) - 1))
    params = []
    for i in range(len(dims) - 1):
        fan_in, fan_out = dims[i], dims[i + 1]
        scale = 1.0 / jnp.sqrt(fan_in)
        w = jax.random.uniform(keys[2 * i], (ensemble_size, fan_in, fan_out),
                               minval=-scale, maxval=scale, dtype=jnp.float32)
        b = jax.random.uniform(keys[2 * i + 1], (ensemble_size, fan_out),
                               minval=-scale, maxval=scale, dtype=jnp.float32)
        params += [w, b]
    return tuple(params)


def reference_forward(obs, act, params):
    """Pure-JAX reference mirroring the PyTorch module (inference mode)."""
    x = jnp.concatenate([obs, act], axis=-1)
    w1, b1, w2, b2, w3, b3, w4, b4 = params
    outs = []
    for e in range(w1.shape[0]):
        h = _leaky_relu(x @ w1[e] + b1[e])
        h = _leaky_relu(h @ w2[e] + b2[e])
        h = _leaky_relu(h @ w3[e] + b3[e])
        r = (h @ w4[e] + b4[e])[..., 0]
        outs.append(r)
    return jnp.stack(outs, axis=-1)


if __name__ == "__main__":
    key = jax.random.PRNGKey(0)
    k_obs, k_act, k_par = jax.random.split(key, 3)

    batch, fragment = 2, 8
    obs_dim, act_dim = 24, 8          # D = 32
    hidden_dims = [128, 128, 128]     # lane-aligned hidden width
    ensemble_size = 3

    obs = jax.random.normal(k_obs, (batch, fragment, obs_dim), dtype=jnp.float32)
    act = jax.random.normal(k_act, (batch, fragment, act_dim), dtype=jnp.float32)
    params = init_params(k_par, obs_dim, act_dim, hidden_dims, ensemble_size)

    ref = reference_forward(obs, act, params)

    # f32 operand path: tight numerical check against the f32 reference.
    out_f32 = reward_ensemble_forward(obs, act, params, compute_dtype=jnp.float32)
    out_f32 = jax.block_until_ready(out_f32)
    assert out_f32.shape == (batch, fragment, ensemble_size), out_f32.shape
    assert jnp.allclose(out_f32, ref, atol=1e-4, rtol=1e-4), "f32 mismatch vs reference"

    # Production path (bf16 MXU operands, f32 accumulation): loose check.
    out_bf16 = reward_ensemble_forward(obs, act, params)
    out_bf16 = jax.block_until_ready(out_bf16)
    assert out_bf16.shape == (batch, fragment, ensemble_size), out_bf16.shape
    max_err = float(jnp.max(jnp.abs(out_bf16 - ref)))
    assert max_err < 1e-1, f"bf16 path error too large: {max_err}"

    print("KERNEL_OK")
</pallas_src>

<mosaic_0001>
module attributes {stable_mosaic.version = 11 : i64} {
  func.func @reward_ensemble_kernel(%arg0: i32, %arg1: memref<128x32xf32, #tpu.memory_space<vmem>>, %arg2: memref<32x384xf32, #tpu.memory_space<vmem>>, %arg3: memref<1x384xf32, #tpu.memory_space<vmem>>, %arg4: memref<3x128x128xf32, #tpu.memory_space<vmem>>, %arg5: memref<3x1x128xf32, #tpu.memory_space<vmem>>, %arg6: memref<3x128x128xf32, #tpu.memory_space<vmem>>, %arg7: memref<3x1x128xf32, #tpu.memory_space<vmem>>, %arg8: memref<3x1x128xf32, #tpu.memory_space<vmem>>, %arg9: memref<3xf32, #tpu.memory_space<smem>>, %arg10: memref<3x128xf32, #tpu.memory_space<vmem>>) attributes {dimension_semantics = [#tpu.dimension_semantics<parallel>], iteration_bounds = array<i64: 1>, scalar_prefetch = 0 : i64, scratch_operands = 0 : i64, tpu.core_type = #tpu.core_type<tc>, window_params = [{transform_indices = @transform_0, window_bounds = array<i64: 128, 32>}, {pipeline_mode = #tpu.pipeline_mode<synchronous>, transform_indices = @transform_1, window_bounds = array<i64: 32, 384>}, {pipeline_mode = #tpu.pipeline_mode<synchronous>, transform_indices = @transform_2, window_bounds = array<i64: 1, 384>}, {pipeline_mode = #tpu.pipeline_mode<synchronous>, transform_indices = @transform_3, window_bounds = array<i64: 3, 128, 128>}, {pipeline_mode = #tpu.pipeline_mode<synchronous>, transform_indices = @transform_4, window_bounds = array<i64: 3, 1, 128>}, {pipeline_mode = #tpu.pipeline_mode<synchronous>, transform_indices = @transform_5, window_bounds = array<i64: 3, 128, 128>}, {pipeline_mode = #tpu.pipeline_mode<synchronous>, transform_indices = @transform_6, window_bounds = array<i64: 3, 1, 128>}, {pipeline_mode = #tpu.pipeline_mode<synchronous>, transform_indices = @transform_7, window_bounds = array<i64: 3, 1, 128>}, {transform_indices = @transform_8, window_bounds = array<i64: 3>}, {transform_indices = @transform_9, window_bounds = array<i64: 3, 128>}]} {
    %c0 = arith.constant 0 : index
    %c0_0 = arith.constant 0 : index
    %0 = vector.load %arg1[%c0, %c0_0] : memref<128x32xf32, #tpu.memory_space<vmem>>, vector<128x32xf32>
    %c0_1 = arith.constant 0 : index
    %c0_2 = arith.constant 0 : index
    %1 = vector.load %arg2[%c0_1, %c0_2] : memref<32x384xf32, #tpu.memory_space<vmem>>, vector<32x384xf32>
    %cst = arith.constant dense<0.000000e+00> : vector<128x384xf32>
    %2 = tpu.matmul %0, %1, %cst {dimension_numbers = #tpu.dot_dimension_numbers<[1], [0], [0], [1], [0, 0, 1, 1], [], []>} : vector<128x32xf32>, vector<32x384xf32>, vector<128x384xf32> -> vector<128x384xf32>
    %c0_3 = arith.constant 0 : index
    %c0_4 = arith.constant 0 : index
    %3 = vector.load %arg3[%c0_3, %c0_4] : memref<1x384xf32, #tpu.memory_space<vmem>>, vector<1x384xf32>
    %4 = vector.broadcast %3 : vector<1x384xf32> to vector<128x384xf32>
    %5 = arith.addf %2, %4 : vector<128x384xf32>
    %cst_5 = arith.constant 0.000000e+00 : f32
    %6 = vector.broadcast %cst_5 : f32 to vector<128x384xf32>
    %7 = arith.cmpf ogt, %5, %6 : vector<128x384xf32>
    %cst_6 = arith.constant 0.00999999977 : f32
    %8 = vector.broadcast %cst_6 : f32 to vector<128x384xf32>
    %9 = arith.mulf %8, %5 : vector<128x384xf32>
    %10 = arith.select %7, %5, %9 : vector<128x384xi1>, vector<128x384xf32>
    %11 = vector.extract_strided_slice %10 {offsets = [0, 0], sizes = [128, 128], strides = [1, 1]} : vector<128x384xf32> to vector<128x128xf32>
    %c0_7 = arith.constant 0 : index
    %c0_8 = arith.constant 0 : index
    %c0_9 = arith.constant 0 : index
    %12 = vector.load %arg4[%c0_7, %c0_8, %c0_9] : memref<3x128x128xf32, #tpu.memory_space<vmem>>, vector<1x128x128xf32>
    %13 = vector.shape_cast %12 : vector<1x128x128xf32> to vector<128x128xf32>
    %cst_10 = arith.constant dense<0.000000e+00> : vector<128x128xf32>
    %14 = tpu.matmul %11, %13, %cst_10 {dimension_numbers = #tpu.dot_dimension_numbers<[1], [0], [0], [1], [0, 0, 1, 1], [], []>} : vector<128x128xf32>, vector<128x128xf32>, vector<128x128xf32> -> vector<128x128xf32>
    %c0_11 = arith.constant 0 : index
    %c0_12 = arith.constant 0 : index
    %c0_13 = arith.constant 0 : index
    %15 = vector.load %arg5[%c0_11, %c0_12, %c0_13] : memref<3x1x128xf32, #tpu.memory_space<vmem>>, vector<1x1x128xf32>
    %16 = vector.shape_cast %15 : vector<1x1x128xf32> to vector<1x128xf32>
    %17 = vector.broadcast %16 : vector<1x128xf32> to vector<128x128xf32>
    %18 = arith.addf %14, %17 : vector<128x128xf32>
    %cst_14 = arith.constant 0.000000e+00 : f32
    %19 = vector.broadcast %cst_14 : f32 to vector<128x128xf32>
    %20 = arith.cmpf ogt, %18, %19 : vector<128x128xf32>
    %cst_15 = arith.constant 0.00999999977 : f32
    %21 = vector.broadcast %cst_15 : f32 to vector<128x128xf32>
    %22 = arith.mulf %21, %18 : vector<128x128xf32>
    %23 = arith.select %20, %18, %22 : vector<128x128xi1>, vector<128x128xf32>
    %c0_16 = arith.constant 0 : index
    %c0_17 = arith.constant 0 : index
    %c0_18 = arith.constant 0 : index
    %24 = vector.load %arg6[%c0_16, %c0_17, %c0_18] : memref<3x128x128xf32, #tpu.memory_space<vmem>>, vector<1x128x128xf32>
    %25 = vector.shape_cast %24 : vector<1x128x128xf32> to vector<128x128xf32>
    %cst_19 = arith.constant dense<0.000000e+00> : vector<128x128xf32>
    %26 = tpu.matmul %23, %25, %cst_19 {dimension_numbers = #tpu.dot_dimension_numbers<[1], [0], [0], [1], [0, 0, 1, 1], [], []>} : vector<128x128xf32>, vector<128x128xf32>, vector<128x128xf32> -> vector<128x128xf32>
    %c0_20 = arith.constant 0 : index
    %c0_21 = arith.constant 0 : index
    %c0_22 = arith.constant 0 : index
    %27 = vector.load %arg7[%c0_20, %c0_21, %c0_22] : memref<3x1x128xf32, #tpu.memory_space<vmem>>, vector<1x1x128xf32>
    %28 = vector.shape_cast %27 : vector<1x1x128xf32> to vector<1x128xf32>
    %29 = vector.broadcast %28 : vector<1x128xf32> to vector<128x128xf32>
    %30 = arith.addf %26, %29 : vector<128x128xf32>
    %cst_23 = arith.constant 0.000000e+00 : f32
    %31 = vector.broadcast %cst_23 : f32 to vector<128x128xf32>
    %32 = arith.cmpf ogt, %30, %31 : vector<128x128xf32>
    %cst_24 = arith.constant 0.00999999977 : f32
    %33 = vector.broadcast %cst_24 : f32 to vector<128x128xf32>
    %34 = arith.mulf %33, %30 : vector<128x128xf32>
    %35 = arith.select %32, %30, %34 : vector<128x128xi1>, vector<128x128xf32>
    %c0_25 = arith.constant 0 : index
    %c0_26 = arith.constant 0 : index
    %c0_27 = arith.constant 0 : index
    %36 = vector.load %arg8[%c0_25, %c0_26, %c0_27] : memref<3x1x128xf32, #tpu.memory_space<vmem>>, vector<1x1x128xf32>
    %37 = vector.shape_cast %36 : vector<1x1x128xf32> to vector<1x128xf32>
    %38 = vector.broadcast %37 : vector<1x128xf32> to vector<128x128xf32>
    %39 = arith.mulf %35, %38 : vector<128x128xf32>
    %cst_28 = arith.constant dense<0.000000e+00> : vector<128xf32>
    %40 = vector.multi_reduction <add>, %39, %cst_28 [1] : vector<128x128xf32> to vector<128xf32>
    %c0_29 = arith.constant 0 : index
    %41 = memref.load %arg9[%c0_29] : memref<3xf32, #tpu.memory_space<smem>>
    %42 = vector.broadcast %41 : f32 to vector<128xf32>
    %43 = arith.addf %40, %42 : vector<128xf32>
    %c0_30 = arith.constant 0 : index
    %c0_31 = arith.constant 0 : index
    %44 = vector.load %arg10[%c0_30, %c0_31] : memref<3x128xf32, #tpu.memory_space<vmem>>, vector<1x128xf32>
    %45 = vector.shape_cast %44 : vector<1x128xf32> to vector<128xf32>
    %46 = vector.shape_cast %43 : vector<128xf32> to vector<1x128xf32>
    tpu.vector_store %arg10[%c0_30, %c0_31], %46 {strides = array<i32>} : memref<3x128xf32, #tpu.memory_space<vmem>>, vector<1x128xf32>,
    %47 = vector.extract_strided_slice %10 {offsets = [0, 128], sizes = [128, 128], strides = [1, 1]} : vector<128x384xf32> to vector<128x128xf32>
    %c1 = arith.constant 1 : index
    %c0_32 = arith.constant 0 : index
    %c0_33 = arith.constant 0 : index
    %48 = vector.load %arg4[%c1, %c0_32, %c0_33] : memref<3x128x128xf32, #tpu.memory_space<vmem>>, vector<1x128x128xf32>
    %49 = vector.shape_cast %48 : vector<1x128x128xf32> to vector<128x128xf32>
    %cst_34 = arith.constant dense<0.000000e+00> : vector<128x128xf32>
    %50 = tpu.matmul %47, %49, %cst_34 {dimension_numbers = #tpu.dot_dimension_numbers<[1], [0], [0], [1], [0, 0, 1, 1], [], []>} : vector<128x128xf32>, vector<128x128xf32>, vector<128x128xf32> -> vector<128x128xf32>
    %c1_35 = arith.constant 1 : index
    %c0_36 = arith.constant 0 : index
    %c0_37 = arith.constant 0 : index
    %51 = vector.load %arg5[%c1_35, %c0_36, %c0_37] : memref<3x1x128xf32, #tpu.memory_space<vmem>>, vector<1x1x128xf32>
    %52 = vector.shape_cast %51 : vector<1x1x128xf32> to vector<1x128xf32>
    %53 = vector.broadcast %52 : vector<1x128xf32> to vector<128x128xf32>
    %54 = arith.addf %50, %53 : vector<128x128xf32>
    %cst_38 = arith.constant 0.000000e+00 : f32
    %55 = vector.broadcast %cst_38 : f32 to vector<128x128xf32>
    %56 = arith.cmpf ogt, %54, %55 : vector<128x128xf32>
    %cst_39 = arith.constant 0.00999999977 : f32
    %57 = vector.broadcast %cst_39 : f32 to vector<128x128xf32>
    %58 = arith.mulf %57, %54 : vector<128x128xf32>
    %59 = arith.select %56, %54, %58 : vector<128x128xi1>, vector<128x128xf32>
    %c1_40 = arith.constant 1 : index
    %c0_41 = arith.constant 0 : index
    %c0_42 = arith.constant 0 : index
    %60 = vector.load %arg6[%c1_40, %c0_41, %c0_42] : memref<3x128x128xf32, #tpu.memory_space<vmem>>, vector<1x128x128xf32>
    %61 = vector.shape_cast %60 : vector<1x128x128xf32> to vector<128x128xf32>
    %cst_43 = arith.constant dense<0.000000e+00> : vector<128x128xf32>
    %62 = tpu.matmul %59, %61, %cst_43 {dimension_numbers = #tpu.dot_dimension_numbers<[1], [0], [0], [1], [0, 0, 1, 1], [], []>} : vector<128x128xf32>, vector<128x128xf32>, vector<128x128xf32> -> vector<128x128xf32>
    %c1_44 = arith.constant 1 : index
    %c0_45 = arith.constant 0 : index
    %c0_46 = arith.constant 0 : index
    %63 = vector.load %arg7[%c1_44, %c0_45, %c0_46] : memref<3x1x128xf32, #tpu.memory_space<vmem>>, vector<1x1x128xf32>
    %64 = vector.shape_cast %63 : vector<1x1x128xf32> to vector<1x128xf32>
    %65 = vector.broadcast %64 : vector<1x128xf32> to vector<128x128xf32>
    %66 = arith.addf %62, %65 : vector<128x128xf32>
    %cst_47 = arith.constant 0.000000e+00 : f32
    %67 = vector.broadcast %cst_47 : f32 to vector<128x128xf32>
    %68 = arith.cmpf ogt, %66, %67 : vector<128x128xf32>
    %cst_48 = arith.constant 0.00999999977 : f32
    %69 = vector.broadcast %cst_48 : f32 to vector<128x128xf32>
    %70 = arith.mulf %69, %66 : vector<128x128xf32>
    %71 = arith.select %68, %66, %70 : vector<128x128xi1>, vector<128x128xf32>
    %c1_49 = arith.constant 1 : index
    %c0_50 = arith.constant 0 : index
    %c0_51 = arith.constant 0 : index
    %72 = vector.load %arg8[%c1_49, %c0_50, %c0_51] : memref<3x1x128xf32, #tpu.memory_space<vmem>>, vector<1x1x128xf32>
    %73 = vector.shape_cast %72 : vector<1x1x128xf32> to vector<1x128xf32>
    %74 = vector.broadcast %73 : vector<1x128xf32> to vector<128x128xf32>
    %75 = arith.mulf %71, %74 : vector<128x128xf32>
    %cst_52 = arith.constant dense<0.000000e+00> : vector<128xf32>
    %76 = vector.multi_reduction <add>, %75, %cst_52 [1] : vector<128x128xf32> to vector<128xf32>
    %c1_53 = arith.constant 1 : index
    %77 = memref.load %arg9[%c1_53] : memref<3xf32, #tpu.memory_space<smem>>
    %78 = vector.broadcast %77 : f32 to vector<128xf32>
    %79 = arith.addf %76, %78 : vector<128xf32>
    %c1_54 = arith.constant 1 : index
    %c0_55 = arith.constant 0 : index
    %80 = vector.load %arg10[%c1_54, %c0_55] : memref<3x128xf32, #tpu.memory_space<vmem>>, vector<1x128xf32>
    %81 = vector.shape_cast %80 : vector<1x128xf32> to vector<128xf32>
    %82 = vector.shape_cast %79 : vector<128xf32> to vector<1x128xf32>
    tpu.vector_store %arg10[%c1_54, %c0_55], %82 {strides = array<i32>} : memref<3x128xf32, #tpu.memory_space<vmem>>, vector<1x128xf32>,
    %83 = vector.extract_strided_slice %10 {offsets = [0, 256], sizes = [128, 128], strides = [1, 1]} : vector<128x384xf32> to vector<128x128xf32>
    %c2 = arith.constant 2 : index
    %c0_56 = arith.constant 0 : index
    %c0_57 = arith.constant 0 : index
    %84 = vector.load %arg4[%c2, %c0_56, %c0_57] : memref<3x128x128xf32, #tpu.memory_space<vmem>>, vector<1x128x128xf32>
    %85 = vector.shape_cast %84 : vector<1x128x128xf32> to vector<128x128xf32>
    %cst_58 = arith.constant dense<0.000000e+00> : vector<128x128xf32>
    %86 = tpu.matmul %83, %85, %cst_58 {dimension_numbers = #tpu.dot_dimension_numbers<[1], [0], [0], [1], [0, 0, 1, 1], [], []>} : vector<128x128xf32>, vector<128x128xf32>, vector<128x128xf32> -> vector<128x128xf32>
    %c2_59 = arith.constant 2 : index
    %c0_60 = arith.constant 0 : index
    %c0_61 = arith.constant 0 : index
    %87 = vector.load %arg5[%c2_59, %c0_60, %c0_61] : memref<3x1x128xf32, #tpu.memory_space<vmem>>, vector<1x1x128xf32>
    %88 = vector.shape_cast %87 : vector<1x1x128xf32> to vector<1x128xf32>
    %89 = vector.broadcast %88 : vector<1x128xf32> to vector<128x128xf32>
    %90 = arith.addf %86, %89 : vector<128x128xf32>
    %cst_62 = arith.constant 0.000000e+00 : f32
    %91 = vector.broadcast %cst_62 : f32 to vector<128x128xf32>
    %92 = arith.cmpf ogt, %90, %91 : vector<128x128xf32>
    %cst_63 = arith.constant 0.00999999977 : f32
    %93 = vector.broadcast %cst_63 : f32 to vector<128x128xf32>
    %94 = arith.mulf %93, %90 : vector<128x128xf32>
    %95 = arith.select %92, %90, %94 : vector<128x128xi1>, vector<128x128xf32>
    %c2_64 = arith.constant 2 : index
    %c0_65 = arith.constant 0 : index
    %c0_66 = arith.constant 0 : index
    %96 = vector.load %arg6[%c2_64, %c0_65, %c0_66] : memref<3x128x128xf32, #tpu.memory_space<vmem>>, vector<1x128x128xf32>
    %97 = vector.shape_cast %96 : vector<1x128x128xf32> to vector<128x128xf32>
    %cst_67 = arith.constant dense<0.000000e+00> : vector<128x128xf32>
    %98 = tpu.matmul %95, %97, %cst_67 {dimension_numbers = #tpu.dot_dimension_numbers<[1], [0], [0], [1], [0, 0, 1, 1], [], []>} : vector<128x128xf32>, vector<128x128xf32>, vector<128x128xf32> -> vector<128x128xf32>
    %c2_68 = arith.constant 2 : index
    %c0_69 = arith.constant 0 : index
    %c0_70 = arith.constant 0 : index
    %99 = vector.load %arg7[%c2_68, %c0_69, %c0_70] : memref<3x1x128xf32, #tpu.memory_space<vmem>>, vector<1x1x128xf32>
    %100 = vector.shape_cast %99 : vector<1x1x128xf32> to vector<1x128xf32>
    %101 = vector.broadcast %100 : vector<1x128xf32> to vector<128x128xf32>
    %102 = arith.addf %98, %101 : vector<128x128xf32>
    %cst_71 = arith.constant 0.000000e+00 : f32
    %103 = vector.broadcast %cst_71 : f32 to vector<128x128xf32>
    %104 = arith.cmpf ogt, %102, %103 : vector<128x128xf32>
    %cst_72 = arith.constant 0.00999999977 : f32
    %105 = vector.broadcast %cst_72 : f32 to vector<128x128xf32>
    %106 = arith.mulf %105, %102 : vector<128x128xf32>
    %107 = arith.select %104, %102, %106 : vector<128x128xi1>, vector<128x128xf32>
    %c2_73 = arith.constant 2 : index
    %c0_74 = arith.constant 0 : index
    %c0_75 = arith.constant 0 : index
    %108 = vector.load %arg8[%c2_73, %c0_74, %c0_75] : memref<3x1x128xf32, #tpu.memory_space<vmem>>, vector<1x1x128xf32>
    %109 = vector.shape_cast %108 : vector<1x1x128xf32> to vector<1x128xf32>
    %110 = vector.broadcast %109 : vector<1x128xf32> to vector<128x128xf32>
    %111 = arith.mulf %107, %110 : vector<128x128xf32>
    %cst_76 = arith.constant dense<0.000000e+00> : vector<128xf32>
    %112 = vector.multi_reduction <add>, %111, %cst_76 [1] : vector<128x128xf32> to vector<128xf32>
    %c2_77 = arith.constant 2 : index
    %113 = memref.load %arg9[%c2_77] : memref<3xf32, #tpu.memory_space<smem>>
    %114 = vector.broadcast %113 : f32 to vector<128xf32>
    %115 = arith.addf %112, %114 : vector<128xf32>
    %c2_78 = arith.constant 2 : index
    %c0_79 = arith.constant 0 : index
    %116 = vector.load %arg10[%c2_78, %c0_79] : memref<3x128xf32, #tpu.memory_space<vmem>>, vector<1x128xf32>
    %117 = vector.shape_cast %116 : vector<1x128xf32> to vector<128xf32>
    %118 = vector.shape_cast %115 : vector<128xf32> to vector<1x128xf32>
    tpu.vector_store %arg10[%c2_78, %c0_79], %118 {strides = array<i32>} : memref<3x128xf32, #tpu.memory_space<vmem>>, vector<1x128xf32>,
    return
  }
  func.func @transform_0(%arg0: i32) -> (i32, i32) {
    %c0_i32 = arith.constant 0 : i32
    %c0_i32_0 = arith.constant 0 : i32
    return %arg0, %c0_i32 : i32, i32
  }
  func.func @transform_1(%arg0: i32) -> (i32, i32) {
    %c0_i32 = arith.constant 0 : i32
    %c0_i32_0 = arith.constant 0 : i32
    %c0_i32_1 = arith.constant 0 : i32
    return %c0_i32, %c0_i32_0 : i32, i32
  }
  func.func @transform_2(%arg0: i32) -> (i32, i32) {
    %c0_i32 = arith.constant 0 : i32
    %c0_i32_0 = arith.constant 0 : i32
    %c0_i32_1 = arith.constant 0 : i32
    return %c0_i32, %c0_i32_0 : i32, i32
  }
  func.func @transform_3(%arg0: i32) -> (i32, i32, i32) {
    %c0_i32 = arith.constant 0 : i32
    %c0_i32_0 = arith.constant 0 : i32
    %c0_i32_1 = arith.constant 0 : i32
    %c0_i32_2 = arith.constant 0 : i32
    return %c0_i32, %c0_i32_0, %c0_i32_1 : i32, i32, i32
  }
  func.func @transform_4(%arg0: i32) -> (i32, i32, i32) {
    %c0_i32 = arith.constant 0 : i32
    %c0_i32_0 = arith.constant 0 : i32
    %c0_i32_1 = arith.constant 0 : i32
    %c0_i32_2 = arith.constant 0 : i32
    return %c0_i32, %c0_i32_0, %c0_i32_1 : i32, i32, i32
  }
  func.func @transform_5(%arg0: i32) -> (i32, i32, i32) {
    %c0_i32 = arith.constant 0 : i32
    %c0_i32_0 = arith.constant 0 : i32
    %c0_i32_1 = arith.constant 0 : i32
    %c0_i32_2 = arith.constant 0 : i32
    return %c0_i32, %c0_i32_0, %c0_i32_1 : i32, i32, i32
  }
  func.func @transform_6(%arg0: i32) -> (i32, i32, i32) {
    %c0_i32 = arith.constant 0 : i32
    %c0_i32_0 = arith.constant 0 : i32
    %c0_i32_1 = arith.constant 0 : i32
    %c0_i32_2 = arith.constant 0 : i32
    return %c0_i32, %c0_i32_0, %c0_i32_1 : i32, i32, i32
  }
  func.func @transform_7(%arg0: i32) -> (i32, i32, i32) {
    %c0_i32 = arith.constant 0 : i32
    %c0_i32_0 = arith.constant 0 : i32
    %c0_i32_1 = arith.constant 0 : i32
    %c0_i32_2 = arith.constant 0 : i32
    return %c0_i32, %c0_i32_0, %c0_i32_1 : i32, i32, i32
  }
  func.func @transform_8(%arg0: i32) -> i32 {
    %c0_i32 = arith.constant 0 : i32
    %c0_i32_0 = arith.constant 0 : i32
    return %c0_i32 : i32
  }
  func.func @transform_9(%arg0: i32) -> (i32, i32) {
    %c0_i32 = arith.constant 0 : i32
    %c0_i32_0 = arith.constant 0 : i32
    return %c0_i32, %arg0 : i32, i32
  }
}

</mosaic_0001>

<llo_original>
// kernel: tpu_custom_call.1
$region0: #{tpu_custom_call.1}
  #allocation0 [shape = 'u32[]', space=smem, size = 0x4, offset = 0x4, fixed_abs, tag = 'smem constant byte address 0x4 - core index']
  #allocation1 [shape = 'u32[144,128]{1,0:T(1,128)}', space=vmem, size = 0x12000, scoped, tag = 'internal scratch']
  %s0 = inlined_call_operand.vmem [shape: f32[128,32], index: 0, kind: input, shape index: {}]
  %s1 = inlined_call_operand.vmem [shape: f32[32,384], index: 1, kind: input, shape index: {}]
  %s2 = inlined_call_operand.vmem [shape: f32[1,384], index: 2, kind: input, shape index: {}]
  %s3 = inlined_call_operand.hbm [shape: f32[3,128,128], index: 3, kind: input, shape index: {}]
  %s4 = inlined_call_operand.vmem [shape: f32[3,1,128], index: 4, kind: input, shape index: {}]
  %s5 = inlined_call_operand.hbm [shape: f32[3,128,128], index: 5, kind: input, shape index: {}]
  %s6 = inlined_call_operand.vmem [shape: f32[3,1,128], index: 6, kind: input, shape index: {}]
  %s7 = inlined_call_operand.vmem [shape: f32[3,1,128], index: 7, kind: input, shape index: {}]
  %s8 = inlined_call_operand.vmem [shape: f32[3], index: 8, kind: input, shape index: {}]
  %s9 = inlined_call_operand.hbm [shape: f32[3,128], index: 9, kind: output, shape index: {}]
  %s10 = sld [smem:[#allocation0]]
  $region58: #{tpu_custom_call.1} parent=0
    _
  %s12 = ssub.s32 1, %s10
  %s13 = scalar_select 0, %s12, %s10
  $region1: #{tpu_custom_call.1} parent=0
    #allocation2 [shape = 'u8[196608]{0}', space=vmem, size = 0x30000, scoped, tag = 'input window, operand 3, single buffered']
    #allocation3 [shape = 's32[1]{0}', space=sflag, size = 0x4, scoped, tag = 'scoped memory for tpu_custom_call.1']
    #allocation4 [shape = 's32[1]{0}', space=sflag, size = 0x4, scoped, tag = 'scoped memory for tpu_custom_call.1']
    #allocation5 [shape = 's32[1]{0}', space=sflag, size = 0x4, scoped, tag = 'scoped memory for tpu_custom_call.1']
    #allocation6 [shape = 'u8[196608]{0}', space=vmem, size = 0x30000, scoped, tag = 'input window, operand 5, single buffered']
    #allocation7 [shape = 's32[1]{0}', space=sflag, size = 0x4, scoped, tag = 'scoped memory for tpu_custom_call.1']
    #allocation8 [shape = 'u8[512]{0}', space=smem, size = 0x200, scoped, tag = 'input window, operand 8, single buffered']
    #allocation9 [shape = 'u8[2048]{0}', space=vmem, size = 0x800, scoped, tag = 'output window, operand 0, single buffered']
    %14 = vsyncpa [#allocation3], 0
    %15 = vsyncpa [#allocation7], 0
    %16 = vsyncpa [#allocation5], 0
    %17 = vsyncpa [#allocation4], 0
    // Predicated region
    $region2: #{tpu_custom_call.1} parent=1 // pred_check
      _
    $region3: #{tpu_custom_call.1} parent=1 // pred_check_branch
      %19 = sbr.rel (0) target = $region5
    $region4: #{tpu_custom_call.1} parent=1 // pred_region
      _
    $region5: #{tpu_custom_call.1} parent=1 // pred_fallthru
      _
    // Predicated region
    $region6: #{tpu_custom_call.1} parent=1 // pred_check
      _
    $region7: #{tpu_custom_call.1} parent=1 // pred_check_branch
      %21 = sbr.rel (0) target = $region9
    $region8: #{tpu_custom_call.1} parent=1 // pred_region
      _
    $region9: #{tpu_custom_call.1} parent=1 // pred_fallthru
      _
    // Predicated region
    $region10: #{tpu_custom_call.1} parent=1 // pred_check
      _
    $region11: #{tpu_custom_call.1} parent=1 // pred_check_branch
      %23 = sbr.rel (0) target = $region13
    $region12: #{tpu_custom_call.1} parent=1 // pred_region
      _
    $region13: #{tpu_custom_call.1} parent=1 // pred_fallthru
      _
    // Predicated region
    $region14: #{tpu_custom_call.1} parent=1 // pred_check
      _
    $region15: #{tpu_custom_call.1} parent=1 // pred_check_branch
      %25 = sbr.rel (0) target = $region17
    $region16: #{tpu_custom_call.1} parent=1 // pred_region
      %s27 = ssub.s32 6144, 6144
      %28 = vsyncadd [#allocation3], %s27
      %s29 = sshll.u32 [#allocation2], 4
      %s30 = int_to_ptr.vmem [resolvable:$true] %s29
      %35 = dma.hbm_to_vmem [thread:$0]  %s3, 6144, %s30, [#allocation3], 128, 128, 8
    $region17: #{tpu_custom_call.1} parent=1 // pred_fallthru
      _
    // Predicated region
    $region18: #{tpu_custom_call.1} parent=1 // pred_check
      _
    $region19: #{tpu_custom_call.1} parent=1 // pred_check_branch
      %37 = sbr.rel (0) target = $region21
    $region20: #{tpu_custom_call.1} parent=1 // pred_region
      _
    $region21: #{tpu_custom_call.1} parent=1 // pred_fallthru
      _
    // Predicated region
    $region22: #{tpu_custom_call.1} parent=1 // pred_check
      _
    $region23: #{tpu_custom_call.1} parent=1 // pred_check_branch
      %39 = sbr.rel (0) target = $region25
    $region24: #{tpu_custom_call.1} parent=1 // pred_region
      %s41 = ssub.s32 6144, 6144
      %42 = vsyncadd [#allocation7], %s41
      %s43 = sshll.u32 [#allocation6], 4
      %s44 = int_to_ptr.vmem [resolvable:$true] %s43
      %49 = dma.hbm_to_vmem [thread:$0]  %s5, 6144, %s44, [#allocation7], 128, 128, 8
    $region25: #{tpu_custom_call.1} parent=1 // pred_fallthru
      _
    // Predicated region
    $region26: #{tpu_custom_call.1} parent=1 // pred_check
      _
    $region27: #{tpu_custom_call.1} parent=1 // pred_check_branch
      %51 = sbr.rel (0) target = $region29
    $region28: #{tpu_custom_call.1} parent=1 // pred_region
      _
    $region29: #{tpu_custom_call.1} parent=1 // pred_fallthru
      _
    // Predicated region
    $region30: #{tpu_custom_call.1} parent=1 // pred_check
      _
    $region31: #{tpu_custom_call.1} parent=1 // pred_check_branch
      %53 = sbr.rel (0) target = $region33
    $region32: #{tpu_custom_call.1} parent=1 // pred_region
      _
    $region33: #{tpu_custom_call.1} parent=1 // pred_fallthru
      _
    // Predicated region
    $region34: #{tpu_custom_call.1} parent=1 // pred_check
      _
    $region35: #{tpu_custom_call.1} parent=1 // pred_check_branch
      %55 = sbr.rel (0) target = $region37
    $region36: #{tpu_custom_call.1} parent=1 // pred_region
      %s57 = ssub.s32 16, 16
      %58 = vsyncadd [#allocation5], %s57
      %s60 = sshll.u32 %s8, 4
      %s61 = int_to_ptr.vmem [resolvable:$true] %s60
      %63 = dma.vmem_to_smem %s61, 16, [#allocation8], [#allocation5]
    $region37: #{tpu_custom_call.1} parent=1 // pred_fallthru
      _
    // Predicated region
    $region38: #{tpu_custom_call.1} parent=1 // pred_check
      _
    $region39: #{tpu_custom_call.1} parent=1 // pred_check_branch
      %65 = sbr.rel (0) target = $region41
    $region40: #{tpu_custom_call.1} parent=1 // pred_region
      %66 = dma.done [#allocation3], 6144
    $region41: #{tpu_custom_call.1} parent=1 // pred_fallthru
      _
    // Predicated region
    $region42: #{tpu_custom_call.1} parent=1 // pred_check
      _
    $region43: #{tpu_custom_call.1} parent=1 // pred_check_branch
      %68 = sbr.rel (0) target = $region45
    $region44: #{tpu_custom_call.1} parent=1 // pred_region
      %69 = dma.done [#allocation7], 6144
    $region45: #{tpu_custom_call.1} parent=1 // pred_fallthru
      _
    // Predicated region
    $region46: #{tpu_custom_call.1} parent=1 // pred_check
      _
    $region47: #{tpu_custom_call.1} parent=1 // pred_check_branch
      %71 = sbr.rel (0) target = $region49
    $region48: #{tpu_custom_call.1} parent=1 // pred_region
      %72 = dma.done [#allocation5], 16
    $region49: #{tpu_custom_call.1} parent=1 // pred_fallthru
      _
    %73 = sfence
    %v74 = vld [vmem:[%s0] sm:$0xff]
    %v75 = vld [vmem:[%s0 + $0x8] sm:$0xff]
    %v76 = vld [vmem:[%s0 + $0x10] sm:$0xff]
    %v77 = vld [vmem:[%s0 + $0x18] sm:$0xff]
    %v78 = vld [vmem:[%s0 + $0x20] sm:$0xff]
    %v79 = vld [vmem:[%s0 + $0x28] sm:$0xff]
    %v80 = vld [vmem:[%s0 + $0x30] sm:$0xff]
    %v81 = vld [vmem:[%s0 + $0x38] sm:$0xff]
    %v82 = vld [vmem:[%s0 + $0x40] sm:$0xff]
    %v83 = vld [vmem:[%s0 + $0x48] sm:$0xff]
    %v84 = vld [vmem:[%s0 + $0x50] sm:$0xff]
    %v85 = vld [vmem:[%s0 + $0x58] sm:$0xff]
    %v86 = vld [vmem:[%s0 + $0x60] sm:$0xff]
    %v87 = vld [vmem:[%s0 + $0x68] sm:$0xff]
    %v88 = vld [vmem:[%s0 + $0x70] sm:$0xff]
    %v89 = vld [vmem:[%s0 + $0x78] sm:$0xff]
    %v90 = vld [vmem:[%s1] sm:$0xff]
    %v91 = vld [vmem:[%s1 + $0x8] sm:$0xff]
    %v92 = vld [vmem:[%s1 + $0x10] sm:$0xff]
    %v93 = vld [vmem:[%s1 + $0x18] sm:$0xff]
    %v94 = vld [vmem:[%s1 + $0x20] sm:$0xff]
    %v95 = vld [vmem:[%s1 + $0x28] sm:$0xff]
    %v96 = vld [vmem:[%s1 + $0x30] sm:$0xff]
    %v97 = vld [vmem:[%s1 + $0x38] sm:$0xff]
    %v98 = vld [vmem:[%s1 + $0x40] sm:$0xff]
    %v99 = vld [vmem:[%s1 + $0x48] sm:$0xff]
    %v100 = vld [vmem:[%s1 + $0x50] sm:$0xff]
    %v101 = vld [vmem:[%s1 + $0x58] sm:$0xff]
    %v102 = vld [vmem:[%s2] sm:$0x7]
    %v104 = vlaneseq
    %v105 = vshrl.u32 %v104, 7
    %v106 = vsub.s32 0, %v105
    %v107 = vrot.slane %v102, %v106
    %v108 = vlaneseq
    %v109 = vshrl.u32 %v108, 7
    %v110 = vsub.s32 1, %v109
    %v111 = vrot.slane %v102, %v110
    %v112 = vlaneseq
    %v113 = vshrl.u32 %v112, 7
    %v114 = vsub.s32 2, %v113
    %v115 = vrot.slane %v102, %v114
    %vm119 = vcmask 261120
    %v121 = vsel %vm119, %v74, 0
    %v124 = vsel %vm119, %v75, 0
    %v127 = vsel %vm119, %v76, 0
    %v130 = vsel %vm119, %v77, 0
    %v133 = vsel %vm119, %v78, 0
    %v136 = vsel %vm119, %v79, 0
    %v139 = vsel %vm119, %v80, 0
    %v142 = vsel %vm119, %v81, 0
    %v145 = vsel %vm119, %v82, 0
    %v148 = vsel %vm119, %v83, 0
    %v151 = vsel %vm119, %v84, 0
    %v154 = vsel %vm119, %v85, 0
    %v157 = vsel %vm119, %v86, 0
    %v160 = vsel %vm119, %v87, 0
    %v163 = vsel %vm119, %v88, 0
    %v166 = vsel %vm119, %v89, 0
    %168 = vmatprep.subr.mxu0 0.0
    %169 = vmatpush1.msra.mxu0 0.0
    %170 = vmatprep.subr.mxu0 0.0
    %171 = vmatpush1.msra.mxu0 0.0
    %172 = vmatprep.subr.mxu0 0.0
    %173 = vmatpush1.msra.mxu0 0.0
    %174 = vmatprep.subr.mxu0 0.0
    %175 = vmatpush1.msra.mxu0 0.0
    %176 = vmatprep.subr.mxu0 0.0
    %177 = vmatpush1.msra.mxu0 0.0
    %178 = vmatprep.subr.mxu0 0.0
    %179 = vmatpush1.msra.mxu0 0.0
    %180 = vmatprep.subr.mxu0 0.0
    %181 = vmatpush1.msra.mxu0 0.0
    %182 = vmatprep.subr.mxu0 0.0
    %183 = vmatpush1.msra.mxu0 0.0
    %184 = vmatprep.subr.mxu0 0.0
    %185 = vmatpush1.msra.mxu0 0.0
    %186 = vmatprep.subr.mxu0 0.0
    %187 = vmatpush1.msra.mxu0 0.0
    %188 = vmatprep.subr.mxu0 0.0
    %189 = vmatpush1.msra.mxu0 0.0
    %190 = vmatprep.subr.mxu0 0.0
    %191 = vmatpush1.msra.mxu0 0.0
    %192 = vmatprep.subr.mxu0 %v100
    %193 = vmatpush1.msra.mxu0 %v99
    %194 = vmatprep.subr.mxu0 %v97
    %195 = vmatpush1.msra.mxu0 %v96
    %196 = vmatprep.subr.mxu0 %v94
    %197 = vmatpush1.msra.mxu0 %v93
    %198 = vmatprep.subr.mxu0 %v91
    %199 = vmatpush1.msra.mxu0 %v90
    %200 = vmatprep.subr.mxu0 0.0
    %201 = vmatpush2.msra.mxu0 0.0
    %202 = vmatprep.subr.mxu0 0.0
    %203 = vmatpush2.msra.mxu0 0.0
    %204 = vmatprep.subr.mxu0 0.0
    %205 = vmatpush2.msra.mxu0 0.0
    %206 = vmatprep.subr.mxu0 0.0
    %207 = vmatpush2.msra.mxu0 0.0
    %208 = vmatprep.subr.mxu0 0.0
    %209 = vmatpush2.msra.mxu0 0.0
    %210 = vmatprep.subr.mxu0 0.0
    %211 = vmatpush2.msra.mxu0 0.0
    %212 = vmatprep.subr.mxu0 0.0
    %213 = vmatpush2.msra.mxu0 0.0
    %214 = vmatprep.subr.mxu0 0.0
    %215 = vmatpush2.msra.mxu0 0.0
    %216 = vmatprep.subr.mxu0 0.0
    %217 = vmatpush2.msra.mxu0 0.0
    %218 = vmatprep.subr.mxu0 0.0
    %219 = vmatpush2.msra.mxu0 0.0
    %220 = vmatprep.subr.mxu0 0.0
    %221 = vmatpush2.msra.mxu0 0.0
    %222 = vmatprep.subr.mxu0 0.0
    %223 = vmatpush2.msra.mxu0 0.0
    %224 = vmatprep.subr.mxu0 0.0
    %225 = vmatpush2.msra.mxu0 0.0
    %226 = vmatprep.subr.mxu0 0.0
    %227 = vmatpush2.msra.mxu0 0.0
    %228 = vmatprep.subr.mxu0 0.0
    %229 = vmatpush2.msra.mxu0 0.0
    %230 = vmatprep.subr.mxu0 0.0
    %231 = vmatpush2.msra.mxu0 0.0
    %232 = vmatprep.mubr.f32.mxu0 0.0
    %233 = vmatmul.mubr.f32.gmra.mxu0 %v121
    %v234 = vpop.f32.mrf.mxu0
    %v235 = vadd.f32 %v107, %v234
    %v236 = vpop.f32.mrf.mxu0
    %v237 = vadd.f32 %v111, %v236
    %238 = vmatprep.mubr.f32.mxu0 0.0
    %239 = vmatmul.mubr.f32.gmra.mxu0 %v124
    %v240 = vpop.f32.mrf.mxu0
    %v241 = vadd.f32 %v107, %v240
    %v242 = vpop.f32.mrf.mxu0
    %v243 = vadd.f32 %v111, %v242
    %244 = vmatprep.mubr.f32.mxu0 0.0
    %245 = vmatmul.mubr.f32.gmra.mxu0 %v127
    %v246 = vpop.f32.mrf.mxu0
    %v247 = vadd.f32 %v107, %v246
    %v248 = vpop.f32.mrf.mxu0
    %v249 = vadd.f32 %v111, %v248
    %250 = vmatprep.mubr.f32.mxu0 0.0
    %251 = vmatmul.mubr.f32.gmra.mxu0 %v130
    %v252 = vpop.f32.mrf.mxu0
    %v253 = vadd.f32 %v107, %v252
    %v254 = vpop.f32.mrf.mxu0
    %v255 = vadd.f32 %v111, %v254
    %256 = vmatprep.mubr.f32.mxu0 0.0
    %257 = vmatmul.mubr.f32.gmra.mxu0 %v133
    %v258 = vpop.f32.mrf.mxu0
    %v259 = vadd.f32 %v107, %v258
    %v260 = vpop.f32.mrf.mxu0
    %v261 = vadd.f32 %v111, %v260
    %262 = vmatprep.mubr.f32.mxu0 0.0
    %263 = vmatmul.mubr.f32.gmra.mxu0 %v136
    %v264 = vpop.f32.mrf.mxu0
    %v265 = vadd.f32 %v107, %v264
    %v266 = vpop.f32.mrf.mxu0
    %v267 = vadd.f32 %v111, %v266
    %268 = vmatprep.mubr.f32.mxu0 0.0
    %269 = vmatmul.mubr.f32.gmra.mxu0 %v139
    %v270 = vpop.f32.mrf.mxu0
    %v271 = vadd.f32 %v107, %v270
    %v272 = vpop.f32.mrf.mxu0
    %v273 = vadd.f32 %v111, %v272
    %274 = vmatprep.mubr.f32.mxu0 0.0
    %275 = vmatmul.mubr.f32.gmra.mxu0 %v142
    %v276 = vpop.f32.mrf.mxu0
    %v277 = vadd.f32 %v107, %v276
    %v278 = vpop.f32.mrf.mxu0
    %v279 = vadd.f32 %v111, %v278
    %280 = vmatprep.mubr.f32.mxu0 0.0
    %281 = vmatmul.mubr.f32.gmra.mxu0 %v145
    %v282 = vpop.f32.mrf.mxu0
    %v283 = vadd.f32 %v107, %v282
    %v284 = vpop.f32.mrf.mxu0
    %v285 = vadd.f32 %v111, %v284
    %286 = vmatprep.mubr.f32.mxu0 0.0
    %287 = vmatmul.mubr.f32.gmra.mxu0 %v148
    %v288 = vpop.f32.mrf.mxu0
    %v289 = vadd.f32 %v107, %v288
    %v290 = vpop.f32.mrf.mxu0
    %v291 = vadd.f32 %v111, %v290
    %292 = vmatprep.mubr.f32.mxu0 0.0
    %293 = vmatmul.mubr.f32.gmra.mxu0 %v151
    %v294 = vpop.f32.mrf.mxu0
    %v295 = vadd.f32 %v107, %v294
    %v296 = vpop.f32.mrf.mxu0
    %v297 = vadd.f32 %v111, %v296
    %298 = vmatprep.mubr.f32.mxu0 0.0
    %299 = vmatmul.mubr.f32.gmra.mxu0 %v154
    %v300 = vpop.f32.mrf.mxu0
    %v301 = vadd.f32 %v107, %v300
    %v302 = vpop.f32.mrf.mxu0
    %v303 = vadd.f32 %v111, %v302
    %304 = vmatprep.mubr.f32.mxu0 0.0
    %305 = vmatmul.mubr.f32.gmra.mxu0 %v157
    %v306 = vpop.f32.mrf.mxu0
    %v307 = vadd.f32 %v107, %v306
    %v308 = vpop.f32.mrf.mxu0
    %v309 = vadd.f32 %v111, %v308
    %310 = vmatprep.mubr.f32.mxu0 0.0
    %311 = vmatmul.mubr.f32.gmra.mxu0 %v160
    %v312 = vpop.f32.mrf.mxu0
    %v313 = vadd.f32 %v107, %v312
    %v314 = vpop.f32.mrf.mxu0
    %v315 = vadd.f32 %v111, %v314
    %316 = vmatprep.mubr.f32.mxu0 0.0
    %317 = vmatmul.mubr.f32.gmra.mxu0 %v163
    %v318 = vpop.f32.mrf.mxu0
    %v319 = vadd.f32 %v107, %v318
    %v320 = vpop.f32.mrf.mxu0
    %v321 = vadd.f32 %v111, %v320
    %322 = vmatprep.mubr.f32.mxu0 0.0
    %323 = vmatmul.mubr.f32.gmra.mxu0 %v166
    %v324 = vpop.f32.mrf.mxu0
    %v325 = vadd.f32 %v107, %v324
    %v326 = vpop.f32.mrf.mxu0
    %v327 = vadd.f32 %v111, %v326
    %328 = vdwg.mxu0
    %329 = vmatprep.subr.mxu0 0.0
    %330 = vmatpush1.msra.mxu0 0.0
    %331 = vmatprep.subr.mxu0 0.0
    %332 = vmatpush1.msra.mxu0 0.0
    %333 = vmatprep.subr.mxu0 0.0
    %334 = vmatpush1.msra.mxu0 0.0
    %335 = vmatprep.subr.mxu0 0.0
    %336 = vmatpush1.msra.mxu0 0.0
    %337 = vmatprep.subr.mxu0 0.0
    %338 = vmatpush1.msra.mxu0 0.0
    %339 = vmatprep.subr.mxu0 0.0
    %340 = vmatpush1.msra.mxu0 0.0
    %341 = vmatprep.subr.mxu0 0.0
    %342 = vmatpush1.msra.mxu0 0.0
    %343 = vmatprep.subr.mxu0 0.0
    %344 = vmatpush1.msra.mxu0 0.0
    %345 = vmatprep.subr.mxu0 0.0
    %346 = vmatpush1.msra.mxu0 0.0
    %347 = vmatprep.subr.mxu0 0.0
    %348 = vmatpush1.msra.mxu0 0.0
    %349 = vmatprep.subr.mxu0 0.0
    %350 = vmatpush1.msra.mxu0 0.0
    %351 = vmatprep.subr.mxu0 0.0
    %352 = vmatpush1.msra.mxu0 0.0
    %353 = vmatprep.subr.mxu0 0.0
    %354 = vmatpush1.msra.mxu0 %v101
    %355 = vmatprep.subr.mxu0 0.0
    %356 = vmatpush1.msra.mxu0 %v98
    %357 = vmatprep.subr.mxu0 0.0
    %358 = vmatpush1.msra.mxu0 %v95
    %359 = vmatprep.subr.mxu0 0.0
    %360 = vmatpush1.msra.mxu0 %v92
    %361 = vmatprep.subr.mxu0 0.0
    %362 = vmatpush2.msra.mxu0 0.0
    %363 = vmatprep.subr.mxu0 0.0
    %364 = vmatpush2.msra.mxu0 0.0
    %365 = vmatprep.subr.mxu0 0.0
    %366 = vmatpush2.msra.mxu0 0.0
    %367 = vmatprep.subr.mxu0 0.0
    %368 = vmatpush2.msra.mxu0 0.0
    %369 = vmatprep.subr.mxu0 0.0
    %370 = vmatpush2.msra.mxu0 0.0
    %371 = vmatprep.subr.mxu0 0.0
    %372 = vmatpush2.msra.mxu0 0.0
    %373 = vmatprep.subr.mxu0 0.0
    %374 = vmatpush2.msra.mxu0 0.0
    %375 = vmatprep.subr.mxu0 0.0
    %376 = vmatpush2.msra.mxu0 0.0
    %377 = vmatprep.subr.mxu0 0.0
    %378 = vmatpush2.msra.mxu0 0.0
    %379 = vmatprep.subr.mxu0 0.0
    %380 = vmatpush2.msra.mxu0 0.0
    %381 = vmatprep.subr.mxu0 0.0
    %382 = vmatpush2.msra.mxu0 0.0
    %383 = vmatprep.subr.mxu0 0.0
    %384 = vmatpush2.msra.mxu0 0.0
    %385 = vmatprep.subr.mxu0 0.0
    %386 = vmatpush2.msra.mxu0 0.0
    %387 = vmatprep.subr.mxu0 0.0
    %388 = vmatpush2.msra.mxu0 0.0
    %389 = vmatprep.subr.mxu0 0.0
    %390 = vmatpush2.msra.mxu0 0.0
    %391 = vmatprep.subr.mxu0 0.0
    %392 = vmatpush2.msra.mxu0 0.0
    %393 = vmatprep.mubr.f32.mxu0 0.0
    %394 = vmatmul.mubr.f32.gmra.mxu0 %v121
    %v395 = vpop.f32.mrf.mxu0
    %v396 = vadd.f32 %v115, %v395
    %v397 = vpop.f32.mrf.mxu0
    %398 = vmatprep.mubr.f32.mxu0 0.0
    %399 = vmatmul.mubr.f32.gmra.mxu0 %v124
    %v400 = vpop.f32.mrf.mxu0
    %v401 = vadd.f32 %v115, %v400
    %v402 = vpop.f32.mrf.mxu0
    %403 = vmatprep.mubr.f32.mxu0 0.0
    %404 = vmatmul.mubr.f32.gmra.mxu0 %v127
    %v405 = vpop.f32.mrf.mxu0
    %v406 = vadd.f32 %v115, %v405
    %v407 = vpop.f32.mrf.mxu0
    %408 = vmatprep.mubr.f32.mxu0 0.0
    %409 = vmatmul.mubr.f32.gmra.mxu0 %v130
    %v410 = vpop.f32.mrf.mxu0
    %v411 = vadd.f32 %v115, %v410
    %v412 = vpop.f32.mrf.mxu0
    %413 = vmatprep.mubr.f32.mxu0 0.0
    %414 = vmatmul.mubr.f32.gmra.mxu0 %v133
    %v415 = vpop.f32.mrf.mxu0
    %v416 = vadd.f32 %v115, %v415
    %v417 = vpop.f32.mrf.mxu0
    %418 = vmatprep.mubr.f32.mxu0 0.0
    %419 = vmatmul.mubr.f32.gmra.mxu0 %v136
    %v420 = vpop.f32.mrf.mxu0
    %v421 = vadd.f32 %v115, %v420
    %v422 = vpop.f32.mrf.mxu0
    %423 = vmatprep.mubr.f32.mxu0 0.0
    %424 = vmatmul.mubr.f32.gmra.mxu0 %v139
    %v425 = vpop.f32.mrf.mxu0
    %v426 = vadd.f32 %v115, %v425
    %v427 = vpop.f32.mrf.mxu0
    %428 = vmatprep.mubr.f32.mxu0 0.0
    %429 = vmatmul.mubr.f32.gmra.mxu0 %v142
    %v430 = vpop.f32.mrf.mxu0
    %v431 = vadd.f32 %v115, %v430
    %v432 = vpop.f32.mrf.mxu0
    %433 = vmatprep.mubr.f32.mxu0 0.0
    %434 = vmatmul.mubr.f32.gmra.mxu0 %v145
    %v435 = vpop.f32.mrf.mxu0
    %v436 = vadd.f32 %v115, %v435
    %v437 = vpop.f32.mrf.mxu0
    %438 = vmatprep.mubr.f32.mxu0 0.0
    %439 = vmatmul.mubr.f32.gmra.mxu0 %v148
    %v440 = vpop.f32.mrf.mxu0
    %v441 = vadd.f32 %v115, %v440
    %v442 = vpop.f32.mrf.mxu0
    %443 = vmatprep.mubr.f32.mxu0 0.0
    %444 = vmatmul.mubr.f32.gmra.mxu0 %v151
    %v445 = vpop.f32.mrf.mxu0
    %v446 = vadd.f32 %v115, %v445
    %v447 = vpop.f32.mrf.mxu0
    %448 = vmatprep.mubr.f32.mxu0 0.0
    %449 = vmatmul.mubr.f32.gmra.mxu0 %v154
    %v450 = vpop.f32.mrf.mxu0
    %v451 = vadd.f32 %v115, %v450
    %v452 = vpop.f32.mrf.mxu0
    %453 = vmatprep.mubr.f32.mxu0 0.0
    %454 = vmatmul.mubr.f32.gmra.mxu0 %v157
    %v455 = vpop.f32.mrf.mxu0
    %v456 = vadd.f32 %v115, %v455
    %v457 = vpop.f32.mrf.mxu0
    %458 = vmatprep.mubr.f32.mxu0 0.0
    %459 = vmatmul.mubr.f32.gmra.mxu0 %v160
    %v460 = vpop.f32.mrf.mxu0
    %v461 = vadd.f32 %v115, %v460
    %v462 = vpop.f32.mrf.mxu0
    %463 = vmatprep.mubr.f32.mxu0 0.0
    %464 = vmatmul.mubr.f32.gmra.mxu0 %v163
    %v465 = vpop.f32.mrf.mxu0
    %v466 = vadd.f32 %v115, %v465
    %v467 = vpop.f32.mrf.mxu0
    %468 = vmatprep.mubr.f32.mxu0 0.0
    %469 = vmatmul.mubr.f32.gmra.mxu0 %v166
    %v470 = vpop.f32.mrf.mxu0
    %v471 = vadd.f32 %v115, %v470
    %v472 = vpop.f32.mrf.mxu0
    %473 = vdwg.mxu0
    %vm474 = vcmp.gt.f32.partialorder %v235, 0.0
    %vm475 = vcmp.gt.f32.partialorder %v237, 0.0
    %vm476 = vcmp.gt.f32.partialorder %v396, 0.0
    %vm477 = vcmp.gt.f32.partialorder %v241, 0.0
    %vm478 = vcmp.gt.f32.partialorder %v243, 0.0
    %vm479 = vcmp.gt.f32.partialorder %v401, 0.0
    %vm480 = vcmp.gt.f32.partialorder %v247, 0.0
    %vm481 = vcmp.gt.f32.partialorder %v249, 0.0
    %vm482 = vcmp.gt.f32.partialorder %v406, 0.0
    %vm483 = vcmp.gt.f32.partialorder %v253, 0.0
    %vm484 = vcmp.gt.f32.partialorder %v255, 0.0
    %vm485 = vcmp.gt.f32.partialorder %v411, 0.0
    %vm486 = vcmp.gt.f32.partialorder %v259, 0.0
    %vm487 = vcmp.gt.f32.partialorder %v261, 0.0
    %vm488 = vcmp.gt.f32.partialorder %v416, 0.0
    %vm489 = vcmp.gt.f32.partialorder %v265, 0.0
    %vm490 = vcmp.gt.f32.partialorder %v267, 0.0
    %vm491 = vcmp.gt.f32.partialorder %v421, 0.0
    %vm492 = vcmp.gt.f32.partialorder %v271, 0.0
    %vm493 = vcmp.gt.f32.partialorder %v273, 0.0
    %vm494 = vcmp.gt.f32.partialorder %v426, 0.0
    %vm495 = vcmp.gt.f32.partialorder %v277, 0.0
    %vm496 = vcmp.gt.f32.partialorder %v279, 0.0
    %vm497 = vcmp.gt.f32.partialorder %v431, 0.0
    %vm498 = vcmp.gt.f32.partialorder %v283, 0.0
    %vm499 = vcmp.gt.f32.partialorder %v285, 0.0
    %vm500 = vcmp.gt.f32.partialorder %v436, 0.0
    %vm501 = vcmp.gt.f32.partialorder %v289, 0.0
    %vm502 = vcmp.gt.f32.partialorder %v291, 0.0
    %vm503 = vcmp.gt.f32.partialorder %v441, 0.0
    %vm504 = vcmp.gt.f32.partialorder %v295, 0.0
    %vm505 = vcmp.gt.f32.partialorder %v297, 0.0
    %vm506 = vcmp.gt.f32.partialorder %v446, 0.0
    %vm507 = vcmp.gt.f32.partialorder %v301, 0.0
    %vm508 = vcmp.gt.f32.partialorder %v303, 0.0
    %vm509 = vcmp.gt.f32.partialorder %v451, 0.0
    %vm510 = vcmp.gt.f32.partialorder %v307, 0.0
    %vm511 = vcmp.gt.f32.partialorder %v309, 0.0
    %vm512 = vcmp.gt.f32.partialorder %v456, 0.0
    %vm513 = vcmp.gt.f32.partialorder %v313, 0.0
    %vm514 = vcmp.gt.f32.partialorder %v315, 0.0
    %vm515 = vcmp.gt.f32.partialorder %v461, 0.0
    %vm516 = vcmp.gt.f32.partialorder %v319, 0.0
    %vm517 = vcmp.gt.f32.partialorder %v321, 0.0
    %vm518 = vcmp.gt.f32.partialorder %v466, 0.0
    %vm519 = vcmp.gt.f32.partialorder %v325, 0.0
    %vm520 = vcmp.gt.f32.partialorder %v327, 0.0
    %vm521 = vcmp.gt.f32.partialorder %v471, 0.0
    %v522 = vmul.f32 %v235, 0.01
    %v523 = vmul.f32 %v237, 0.01
    %v524 = vmul.f32 %v396, 0.01
    %v525 = vmul.f32 %v241, 0.01
    %v526 = vmul.f32 %v243, 0.01
    %v527 = vmul.f32 %v401, 0.01
    %v528 = vmul.f32 %v247, 0.01
    %v529 = vmul.f32 %v249, 0.01
    %v530 = vmul.f32 %v406, 0.01
    %v531 = vmul.f32 %v253, 0.01
    %v532 = vmul.f32 %v255, 0.01
    %v533 = vmul.f32 %v411, 0.01
    %v534 = vmul.f32 %v259, 0.01
    %v535 = vmul.f32 %v261, 0.01
    %v536 = vmul.f32 %v416, 0.01
    %v537 = vmul.f32 %v265, 0.01
    %v538 = vmul.f32 %v267, 0.01
    %v539 = vmul.f32 %v421, 0.01
    %v540 = vmul.f32 %v271, 0.01
    %v541 = vmul.f32 %v273, 0.01
    %v542 = vmul.f32 %v426, 0.01
    %v543 = vmul.f32 %v277, 0.01
    %v544 = vmul.f32 %v279, 0.01
    %v545 = vmul.f32 %v431, 0.01
    %v546 = vmul.f32 %v283, 0.01
    %v547 = vmul.f32 %v285, 0.01
    %v548 = vmul.f32 %v436, 0.01
    %v549 = vmul.f32 %v289, 0.01
    %v550 = vmul.f32 %v291, 0.01
    %v551 = vmul.f32 %v441, 0.01
    %v552 = vmul.f32 %v295, 0.01
    %v553 = vmul.f32 %v297, 0.01
    %v554 = vmul.f32 %v446, 0.01
    %v555 = vmul.f32 %v301, 0.01
    %v556 = vmul.f32 %v303, 0.01
    %v557 = vmul.f32 %v451, 0.01
    %v558 = vmul.f32 %v307, 0.01
    %v559 = vmul.f32 %v309, 0.01
    %v560 = vmul.f32 %v456, 0.01
    %v561 = vmul.f32 %v313, 0.01
    %v562 = vmul.f32 %v315, 0.01
    %v563 = vmul.f32 %v461, 0.01
    %v564 = vmul.f32 %v319, 0.01
    %v565 = vmul.f32 %v321, 0.01
    %v566 = vmul.f32 %v466, 0.01
    %v567 = vmul.f32 %v325, 0.01
    %v568 = vmul.f32 %v327, 0.01
    %v569 = vmul.f32 %v471, 0.01
    %v570 = vsel %vm474, %v235, %v522
    %v571 = vsel %vm475, %v237, %v523
    %v572 = vsel %vm476, %v396, %v524
    %v573 = vsel %vm477, %v241, %v525
    %v574 = vsel %vm478, %v243, %v526
    %v575 = vsel %vm479, %v401, %v527
    %v576 = vsel %vm480, %v247, %v528
    %v577 = vsel %vm481, %v249, %v529
    %v578 = vsel %vm482, %v406, %v530
    %v579 = vsel %vm483, %v253, %v531
    %v580 = vsel %vm484, %v255, %v532
    %v581 = vsel %vm485, %v411, %v533
    %v582 = vsel %vm486, %v259, %v534
    %v583 = vsel %vm487, %v261, %v535
    %v584 = vsel %vm488, %v416, %v536
    %v585 = vsel %vm489, %v265, %v537
    %v586 = vsel %vm490, %v267, %v538
    %v587 = vsel %vm491, %v421, %v539
    %v588 = vsel %vm492, %v271, %v540
    %v589 = vsel %vm493, %v273, %v541
    %v590 = vsel %vm494, %v426, %v542
    %v591 = vsel %vm495, %v277, %v543
    %v592 = vsel %vm496, %v279, %v544
    %v593 = vsel %vm497, %v431, %v545
    %v594 = vsel %vm498, %v283, %v546
    %v595 = vsel %vm499, %v285, %v547
    %v596 = vsel %vm500, %v436, %v548
    %v597 = vsel %vm501, %v289, %v549
    %v598 = vsel %vm502, %v291, %v550
    %v599 = vsel %vm503, %v441, %v551
    %v600 = vsel %vm504, %v295, %v552
    %v601 = vsel %vm505, %v297, %v553
    %v602 = vsel %vm506, %v446, %v554
    %v603 = vsel %vm507, %v301, %v555
    %v604 = vsel %vm508, %v303, %v556
    %v605 = vsel %vm509, %v451, %v557
    %v606 = vsel %vm510, %v307, %v558
    %v607 = vsel %vm511, %v309, %v559
    %v608 = vsel %vm512, %v456, %v560
    %v609 = vsel %vm513, %v313, %v561
    %v610 = vsel %vm514, %v315, %v562
    %v611 = vsel %vm515, %v461, %v563
    %v612 = vsel %vm516, %v319, %v564
    %v613 = vsel %vm517, %v321, %v565
    %v614 = vsel %vm518, %v466, %v566
    %v615 = vsel %vm519, %v325, %v567
    %v616 = vsel %vm520, %v327, %v568
    %v617 = vsel %vm521, %v471, %v569
    %v618 = vld [vmem:[#allocation2] sm:$0xff]
    %v619 = vld [vmem:[#allocation2 + $0x8] sm:$0xff]
    %v620 = vld [vmem:[#allocation2 + $0x10] sm:$0xff]
    %v621 = vld [vmem:[#allocation2 + $0x18] sm:$0xff]
    %v622 = vld [vmem:[#allocation2 + $0x20] sm:$0xff]
    %v623 = vld [vmem:[#allocation2 + $0x28] sm:$0xff]
    %v624 = vld [vmem:[#allocation2 + $0x30] sm:$0xff]
    %v625 = vld [vmem:[#allocation2 + $0x38] sm:$0xff]
    %v626 = vld [vmem:[#allocation2 + $0x40] sm:$0xff]
    %v627 = vld [vmem:[#allocation2 + $0x48] sm:$0xff]
    %v628 = vld [vmem:[#allocation2 + $0x50] sm:$0xff]
    %v629 = vld [vmem:[#allocation2 + $0x58] sm:$0xff]
    %v630 = vld [vmem:[#allocation2 + $0x60] sm:$0xff]
    %v631 = vld [vmem:[#allocation2 + $0x68] sm:$0xff]
    %v632 = vld [vmem:[#allocation2 + $0x70] sm:$0xff]
    %v633 = vld [vmem:[#allocation2 + $0x78] sm:$0xff]
    %v634 = vld [vmem:[%s4] sm:$0x1]
    %v636 = vlaneseq
    %v637 = vshrl.u32 %v636, 7
    %v638 = vsub.s32 0, %v637
    %v639 = vrot.slane %v634, %v638
    %641 = vmatprep.subr.mxu0 0.0
    %642 = vmatpush1.msra.mxu0 %v633
    %643 = vmatprep.subr.mxu0 0.0
    %644 = vmatpush1.msra.mxu0 %v632
    %645 = vmatprep.subr.mxu0 0.0
    %646 = vmatpush1.msra.mxu0 %v631
    %647 = vmatprep.subr.mxu0 0.0
    %648 = vmatpush1.msra.mxu0 %v630
    %649 = vmatprep.subr.mxu0 0.0
    %650 = vmatpush1.msra.mxu0 %v629
    %651 = vmatprep.subr.mxu0 0.0
    %652 = vmatpush1.msra.mxu0 %v628
    %653 = vmatprep.subr.mxu0 0.0
    %654 = vmatpush1.msra.mxu0 %v627
    %655 = vmatprep.subr.mxu0 0.0
    %656 = vmatpush1.msra.mxu0 %v626
    %657 = vmatprep.subr.mxu0 0.0
    %658 = vmatpush1.msra.mxu0 %v625
    %659 = vmatprep.subr.mxu0 0.0
    %660 = vmatpush1.msra.mxu0 %v624
    %661 = vmatprep.subr.mxu0 0.0
    %662 = vmatpush1.msra.mxu0 %v623
    %663 = vmatprep.subr.mxu0 0.0
    %664 = vmatpush1.msra.mxu0 %v622
    %665 = vmatprep.subr.mxu0 0.0
    %666 = vmatpush1.msra.mxu0 %v621
    %667 = vmatprep.subr.mxu0 0.0
    %668 = vmatpush1.msra.mxu0 %v620
    %669 = vmatprep.subr.mxu0 0.0
    %670 = vmatpush1.msra.mxu0 %v619
    %671 = vmatprep.subr.mxu0 0.0
    %672 = vmatpush1.msra.mxu0 %v618
    %673 = vmatprep.subr.mxu0 0.0
    %674 = vmatpush2.msra.mxu0 0.0
    %675 = vmatprep.subr.mxu0 0.0
    %676 = vmatpush2.msra.mxu0 0.0
    %677 = vmatprep.subr.mxu0 0.0
    %678 = vmatpush2.msra.mxu0 0.0
    %679 = vmatprep.subr.mxu0 0.0
    %680 = vmatpush2.msra.mxu0 0.0
    %681 = vmatprep.subr.mxu0 0.0
    %682 = vmatpush2.msra.mxu0 0.0
    %683 = vmatprep.subr.mxu0 0.0
    %684 = vmatpush2.msra.mxu0 0.0
    %685 = vmatprep.subr.mxu0 0.0
    %686 = vmatpush2.msra.mxu0 0.0
    %687 = vmatprep.subr.mxu0 0.0
    %688 = vmatpush2.msra.mxu0 0.0
    %689 = vmatprep.subr.mxu0 0.0
    %690 = vmatpush2.msra.mxu0 0.0
    %691 = vmatprep.subr.mxu0 0.0
    %692 = vmatpush2.msra.mxu0 0.0
    %693 = vmatprep.subr.mxu0 0.0
    %694 = vmatpush2.msra.mxu0 0.0
    %695 = vmatprep.subr.mxu0 0.0
    %696 = vmatpush2.msra.mxu0 0.0
    %697 = vmatprep.subr.mxu0 0.0
    %698 = vmatpush2.msra.mxu0 0.0
    %699 = vmatprep.subr.mxu0 0.0
    %700 = vmatpush2.msra.mxu0 0.0
    %701 = vmatprep.subr.mxu0 0.0
    %702 = vmatpush2.msra.mxu0 0.0
    %703 = vmatprep.subr.mxu0 0.0
    %704 = vmatpush2.msra.mxu0 0.0
    %705 = vmatprep.mubr.f32.mxu0 0.0
    %706 = vmatmul.mubr.f32.gmra.mxu0 %v570
    %v707 = vpop.f32.mrf.mxu0
    %v708 = vadd.f32 %v639, %v707
    %v709 = vpop.f32.mrf.mxu0
    %710 = vmatprep.mubr.f32.mxu0 0.0
    %711 = vmatmul.mubr.f32.gmra.mxu0 %v573
    %v712 = vpop.f32.mrf.mxu0
    %v713 = vadd.f32 %v639, %v712
    %v714 = vpop.f32.mrf.mxu0
    %715 = vmatprep.mubr.f32.mxu0 0.0
    %716 = vmatmul.mubr.f32.gmra.mxu0 %v576
    %v717 = vpop.f32.mrf.mxu0
    %v718 = vadd.f32 %v639, %v717
    %v719 = vpop.f32.mrf.mxu0
    %720 = vmatprep.mubr.f32.mxu0 0.0
    %721 = vmatmul.mubr.f32.gmra.mxu0 %v579
    %v722 = vpop.f32.mrf.mxu0
    %v723 = vadd.f32 %v639, %v722
    %v724 = vpop.f32.mrf.mxu0
    %725 = vmatprep.mubr.f32.mxu0 0.0
    %726 = vmatmul.mubr.f32.gmra.mxu0 %v582
    %v727 = vpop.f32.mrf.mxu0
    %v728 = vadd.f32 %v639, %v727
    %v729 = vpop.f32.mrf.mxu0
    %730 = vmatprep.mubr.f32.mxu0 0.0
    %731 = vmatmul.mubr.f32.gmra.mxu0 %v585
    %v732 = vpop.f32.mrf.mxu0
    %v733 = vadd.f32 %v639, %v732
    %v734 = vpop.f32.mrf.mxu0
    %735 = vmatprep.mubr.f32.mxu0 0.0
    %736 = vmatmul.mubr.f32.gmra.mxu0 %v588
    %v737 = vpop.f32.mrf.mxu0
    %v738 = vadd.f32 %v639, %v737
    %v739 = vpop.f32.mrf.mxu0
    %740 = vmatprep.mubr.f32.mxu0 0.0
    %741 = vmatmul.mubr.f32.gmra.mxu0 %v591
    %v742 = vpop.f32.mrf.mxu0
    %v743 = vadd.f32 %v639, %v742
    %v744 = vpop.f32.mrf.mxu0
    %745 = vmatprep.mubr.f32.mxu0 0.0
    %746 = vmatmul.mubr.f32.gmra.mxu0 %v594
    %v747 = vpop.f32.mrf.mxu0
    %v748 = vadd.f32 %v639, %v747
    %v749 = vpop.f32.mrf.mxu0
    %750 = vmatprep.mubr.f32.mxu0 0.0
    %751 = vmatmul.mubr.f32.gmra.mxu0 %v597
    %v752 = vpop.f32.mrf.mxu0
    %v753 = vadd.f32 %v639, %v752
    %v754 = vpop.f32.mrf.mxu0
    %755 = vmatprep.mubr.f32.mxu0 0.0
    %756 = vmatmul.mubr.f32.gmra.mxu0 %v600
    %v757 = vpop.f32.mrf.mxu0
    %v758 = vadd.f32 %v639, %v757
    %v759 = vpop.f32.mrf.mxu0
    %760 = vmatprep.mubr.f32.mxu0 0.0
    %761 = vmatmul.mubr.f32.gmra.mxu0 %v603
    %v762 = vpop.f32.mrf.mxu0
    %v763 = vadd.f32 %v639, %v762
    %v764 = vpop.f32.mrf.mxu0
    %765 = vmatprep.mubr.f32.mxu0 0.0
    %766 = vmatmul.mubr.f32.gmra.mxu0 %v606
    %v767 = vpop.f32.mrf.mxu0
    %v768 = vadd.f32 %v639, %v767
    %v769 = vpop.f32.mrf.mxu0
    %770 = vmatprep.mubr.f32.mxu0 0.0
    %771 = vmatmul.mubr.f32.gmra.mxu0 %v609
    %v772 = vpop.f32.mrf.mxu0
    %v773 = vadd.f32 %v639, %v772
    %v774 = vpop.f32.mrf.mxu0
    %775 = vmatprep.mubr.f32.mxu0 0.0
    %776 = vmatmul.mubr.f32.gmra.mxu0 %v612
    %v777 = vpop.f32.mrf.mxu0
    %v778 = vadd.f32 %v639, %v777
    %v779 = vpop.f32.mrf.mxu0
    %780 = vmatprep.mubr.f32.mxu0 0.0
    %781 = vmatmul.mubr.f32.gmra.mxu0 %v615
    %v782 = vpop.f32.mrf.mxu0
    %v783 = vadd.f32 %v639, %v782
    %v784 = vpop.f32.mrf.mxu0
    %785 = vdwg.mxu0
    %vm786 = vcmp.gt.f32.partialorder %v708, 0.0
    %vm787 = vcmp.gt.f32.partialorder %v713, 0.0
    %vm788 = vcmp.gt.f32.partialorder %v718, 0.0
    %vm789 = vcmp.gt.f32.partialorder %v723, 0.0
    %vm790 = vcmp.gt.f32.partialorder %v728, 0.0
    %vm791 = vcmp.gt.f32.partialorder %v733, 0.0
    %vm792 = vcmp.gt.f32.partialorder %v738, 0.0
    %vm793 = vcmp.gt.f32.partialorder %v743, 0.0
    %vm794 = vcmp.gt.f32.partialorder %v748, 0.0
    %vm795 = vcmp.gt.f32.partialorder %v753, 0.0
    %vm796 = vcmp.gt.f32.partialorder %v758, 0.0
    %vm797 = vcmp.gt.f32.partialorder %v763, 0.0
    %vm798 = vcmp.gt.f32.partialorder %v768, 0.0
    %vm799 = vcmp.gt.f32.partialorder %v773, 0.0
    %vm800 = vcmp.gt.f32.partialorder %v778, 0.0
    %vm801 = vcmp.gt.f32.partialorder %v783, 0.0
    %v802 = vmul.f32 %v708, 0.01
    %v803 = vmul.f32 %v713, 0.01
    %v804 = vmul.f32 %v718, 0.01
    %v805 = vmul.f32 %v723, 0.01
    %v806 = vmul.f32 %v728, 0.01
    %v807 = vmul.f32 %v733, 0.01
    %v808 = vmul.f32 %v738, 0.01
    %v809 = vmul.f32 %v743, 0.01
    %v810 = vmul.f32 %v748, 0.01
    %v811 = vmul.f32 %v753, 0.01
    %v812 = vmul.f32 %v758, 0.01
    %v813 = vmul.f32 %v763, 0.01
    %v814 = vmul.f32 %v768, 0.01
    %v815 = vmul.f32 %v773, 0.01
    %v816 = vmul.f32 %v778, 0.01
    %v817 = vmul.f32 %v783, 0.01
    %v818 = vsel %vm786, %v708, %v802
    %v819 = vsel %vm787, %v713, %v803
    %v820 = vsel %vm788, %v718, %v804
    %v821 = vsel %vm789, %v723, %v805
    %v822 = vsel %vm790, %v728, %v806
    %v823 = vsel %vm791, %v733, %v807
    %v824 = vsel %vm792, %v738, %v808
    %v825 = vsel %vm793, %v743, %v809
    %v826 = vsel %vm794, %v748, %v810
    %v827 = vsel %vm795, %v753, %v811
    %v828 = vsel %vm796, %v758, %v812
    %v829 = vsel %vm797, %v763, %v813
    %v830 = vsel %vm798, %v768, %v814
    %v831 = vsel %vm799, %v773, %v815
    %v832 = vsel %vm800, %v778, %v816
    %v833 = vsel %vm801, %v783, %v817
    %v834 = vld [vmem:[#allocation6] sm:$0xff]
    %v835 = vld [vmem:[#allocation6 + $0x8] sm:$0xff]
    %v836 = vld [vmem:[#allocation6 + $0x10] sm:$0xff]
    %v837 = vld [vmem:[#allocation6 + $0x18] sm:$0xff]
    %v838 = vld [vmem:[#allocation6 + $0x20] sm:$0xff]
    %v839 = vld [vmem:[#allocation6 + $0x28] sm:$0xff]
    %v840 = vld [vmem:[#allocation6 + $0x30] sm:$0xff]
    %v841 = vld [vmem:[#allocation6 + $0x38] sm:$0xff]
    %v842 = vld [vmem:[#allocation6 + $0x40] sm:$0xff]
    %v843 = vld [vmem:[#allocation6 + $0x48] sm:$0xff]
    %v844 = vld [vmem:[#allocation6 + $0x50] sm:$0xff]
    %v845 = vld [vmem:[#allocation6 + $0x58] sm:$0xff]
    %v846 = vld [vmem:[#allocation6 + $0x60] sm:$0xff]
    %v847 = vld [vmem:[#allocation6 + $0x68] sm:$0xff]
    %v848 = vld [vmem:[#allocation6 + $0x70] sm:$0xff]
    %v849 = vld [vmem:[#allocation6 + $0x78] sm:$0xff]
    %v850 = vld [vmem:[%s6] sm:$0x1]
    %v852 = vlaneseq
    %v853 = vshrl.u32 %v852, 7
    %v854 = vsub.s32 0, %v853
    %v855 = vrot.slane %v850, %v854
    %857 = vmatprep.subr.mxu0 0.0
    %858 = vmatpush1.msra.mxu0 %v849
    %859 = vmatprep.subr.mxu0 0.0
    %860 = vmatpush1.msra.mxu0 %v848
    %861 = vmatprep.subr.mxu0 0.0
    %862 = vmatpush1.msra.mxu0 %v847
    %863 = vmatprep.subr.mxu0 0.0
    %864 = vmatpush1.msra.mxu0 %v846
    %865 = vmatprep.subr.mxu0 0.0
    %866 = vmatpush1.msra.mxu0 %v845
    %867 = vmatprep.subr.mxu0 0.0
    %868 = vmatpush1.msra.mxu0 %v844
    %869 = vmatprep.subr.mxu0 0.0
    %870 = vmatpush1.msra.mxu0 %v843
    %871 = vmatprep.subr.mxu0 0.0
    %872 = vmatpush1.msra.mxu0 %v842
    %873 = vmatprep.subr.mxu0 0.0
    %874 = vmatpush1.msra.mxu0 %v841
    %875 = vmatprep.subr.mxu0 0.0
    %876 = vmatpush1.msra.mxu0 %v840
    %877 = vmatprep.subr.mxu0 0.0
    %878 = vmatpush1.msra.mxu0 %v839
    %879 = vmatprep.subr.mxu0 0.0
    %880 = vmatpush1.msra.mxu0 %v838
    %881 = vmatprep.subr.mxu0 0.0
    %882 = vmatpush1.msra.mxu0 %v837
    %883 = vmatprep.subr.mxu0 0.0
    %884 = vmatpush1.msra.mxu0 %v836
    %885 = vmatprep.subr.mxu0 0.0
    %886 = vmatpush1.msra.mxu0 %v835
    %887 = vmatprep.subr.mxu0 0.0
    %888 = vmatpush1.msra.mxu0 %v834
    %889 = vmatprep.subr.mxu0 0.0
    %890 = vmatpush2.msra.mxu0 0.0
    %891 = vmatprep.subr.mxu0 0.0
    %892 = vmatpush2.msra.mxu0 0.0
    %893 = vmatprep.subr.mxu0 0.0
    %894 = vmatpush2.msra.mxu0 0.0
    %895 = vmatprep.subr.mxu0 0.0
    %896 = vmatpush2.msra.mxu0 0.0
    %897 = vmatprep.subr.mxu0 0.0
    %898 = vmatpush2.msra.mxu0 0.0
    %899 = vmatprep.subr.mxu0 0.0
    %900 = vmatpush2.msra.mxu0 0.0
    %901 = vmatprep.subr.mxu0 0.0
    %902 = vmatpush2.msra.mxu0 0.0
    %903 = vmatprep.subr.mxu0 0.0
    %904 = vmatpush2.msra.mxu0 0.0
    %905 = vmatprep.subr.mxu0 0.0
    %906 = vmatpush2.msra.mxu0 0.0
    %907 = vmatprep.subr.mxu0 0.0
    %908 = vmatpush2.msra.mxu0 0.0
    %909 = vmatprep.subr.mxu0 0.0
    %910 = vmatpush2.msra.mxu0 0.0
    %911 = vmatprep.subr.mxu0 0.0
    %912 = vmatpush2.msra.mxu0 0.0
    %913 = vmatprep.subr.mxu0 0.0
    %914 = vmatpush2.msra.mxu0 0.0
    %915 = vmatprep.subr.mxu0 0.0
    %916 = vmatpush2.msra.mxu0 0.0
    %917 = vmatprep.subr.mxu0 0.0
    %918 = vmatpush2.msra.mxu0 0.0
    %919 = vmatprep.subr.mxu0 0.0
    %920 = vmatpush2.msra.mxu0 0.0
    %921 = vmatprep.mubr.f32.mxu0 0.0
    %922 = vmatmul.mubr.f32.gmra.mxu0 %v818
    %v923 = vpop.f32.mrf.mxu0
    %v924 = vadd.f32 %v855, %v923
    %v925 = vpop.f32.mrf.mxu0
    %926 = vmatprep.mubr.f32.mxu0 0.0
    %927 = vmatmul.mubr.f32.gmra.mxu0 %v819
    %v928 = vpop.f32.mrf.mxu0
    %v929 = vadd.f32 %v855, %v928
    %v930 = vpop.f32.mrf.mxu0
    %931 = vmatprep.mubr.f32.mxu0 0.0
    %932 = vmatmul.mubr.f32.gmra.mxu0 %v820
    %v933 = vpop.f32.mrf.mxu0
    %v934 = vadd.f32 %v855, %v933
    %v935 = vpop.f32.mrf.mxu0
    %936 = vmatprep.mubr.f32.mxu0 0.0
    %937 = vmatmul.mubr.f32.gmra.mxu0 %v821
    %v938 = vpop.f32.mrf.mxu0
    %v939 = vadd.f32 %v855, %v938
    %v940 = vpop.f32.mrf.mxu0
    %941 = vmatprep.mubr.f32.mxu0 0.0
    %942 = vmatmul.mubr.f32.gmra.mxu0 %v822
    %v943 = vpop.f32.mrf.mxu0
    %v944 = vadd.f32 %v855, %v943
    %v945 = vpop.f32.mrf.mxu0
    %946 = vmatprep.mubr.f32.mxu0 0.0
    %947 = vmatmul.mubr.f32.gmra.mxu0 %v823
    %v948 = vpop.f32.mrf.mxu0
    %v949 = vadd.f32 %v855, %v948
    %v950 = vpop.f32.mrf.mxu0
    %951 = vmatprep.mubr.f32.mxu0 0.0
    %952 = vmatmul.mubr.f32.gmra.mxu0 %v824
    %v953 = vpop.f32.mrf.mxu0
    %v954 = vadd.f32 %v855, %v953
    %v955 = vpop.f32.mrf.mxu0
    %956 = vmatprep.mubr.f32.mxu0 0.0
    %957 = vmatmul.mubr.f32.gmra.mxu0 %v825
    %v958 = vpop.f32.mrf.mxu0
    %v959 = vadd.f32 %v855, %v958
    %v960 = vpop.f32.mrf.mxu0
    %961 = vmatprep.mubr.f32.mxu0 0.0
    %962 = vmatmul.mubr.f32.gmra.mxu0 %v826
    %v963 = vpop.f32.mrf.mxu0
    %v964 = vadd.f32 %v855, %v963
    %v965 = vpop.f32.mrf.mxu0
    %966 = vmatprep.mubr.f32.mxu0 0.0
    %967 = vmatmul.mubr.f32.gmra.mxu0 %v827
    %v968 = vpop.f32.mrf.mxu0
    %v969 = vadd.f32 %v855, %v968
    %v970 = vpop.f32.mrf.mxu0
    %971 = vmatprep.mubr.f32.mxu0 0.0
    %972 = vmatmul.mubr.f32.gmra.mxu0 %v828
    %v973 = vpop.f32.mrf.mxu0
    %v974 = vadd.f32 %v855, %v973
    %v975 = vpop.f32.mrf.mxu0
    %976 = vmatprep.mubr.f32.mxu0 0.0
    %977 = vmatmul.mubr.f32.gmra.mxu0 %v829
    %v978 = vpop.f32.mrf.mxu0
    %v979 = vadd.f32 %v855, %v978
    %v980 = vpop.f32.mrf.mxu0
    %981 = vmatprep.mubr.f32.mxu0 0.0
    %982 = vmatmul.mubr.f32.gmra.mxu0 %v830
    %v983 = vpop.f32.mrf.mxu0
    %v984 = vadd.f32 %v855, %v983
    %v985 = vpop.f32.mrf.mxu0
    %986 = vmatprep.mubr.f32.mxu0 0.0
    %987 = vmatmul.mubr.f32.gmra.mxu0 %v831
    %v988 = vpop.f32.mrf.mxu0
    %v989 = vadd.f32 %v855, %v988
    %v990 = vpop.f32.mrf.mxu0
    %991 = vmatprep.mubr.f32.mxu0 0.0
    %992 = vmatmul.mubr.f32.gmra.mxu0 %v832
    %v993 = vpop.f32.mrf.mxu0
    %v994 = vadd.f32 %v855, %v993
    %v995 = vpop.f32.mrf.mxu0
    %996 = vmatprep.mubr.f32.mxu0 0.0
    %997 = vmatmul.mubr.f32.gmra.mxu0 %v833
    %v998 = vpop.f32.mrf.mxu0
    %v999 = vadd.f32 %v855, %v998
    %v1000 = vpop.f32.mrf.mxu0
    %1001 = vdwg.mxu0
    %vm1002 = vcmp.gt.f32.partialorder %v924, 0.0
    %vm1003 = vcmp.gt.f32.partialorder %v929, 0.0
    %vm1004 = vcmp.gt.f32.partialorder %v934, 0.0
    %vm1005 = vcmp.gt.f32.partialorder %v939, 0.0
    %vm1006 = vcmp.gt.f32.partialorder %v944, 0.0
    %vm1007 = vcmp.gt.f32.partialorder %v949, 0.0
    %vm1008 = vcmp.gt.f32.partialorder %v954, 0.0
    %vm1009 = vcmp.gt.f32.partialorder %v959, 0.0
    %vm1010 = vcmp.gt.f32.partialorder %v964, 0.0
    %vm1011 = vcmp.gt.f32.partialorder %v969, 0.0
    %vm1012 = vcmp.gt.f32.partialorder %v974, 0.0
    %vm1013 = vcmp.gt.f32.partialorder %v979, 0.0
    %vm1014 = vcmp.gt.f32.partialorder %v984, 0.0
    %vm1015 = vcmp.gt.f32.partialorder %v989, 0.0
    %vm1016 = vcmp.gt.f32.partialorder %v994, 0.0
    %vm1017 = vcmp.gt.f32.partialorder %v999, 0.0
    %v1018 = vmul.f32 %v924, 0.01
    %v1019 = vmul.f32 %v929, 0.01
    %v1020 = vmul.f32 %v934, 0.01
    %v1021 = vmul.f32 %v939, 0.01
    %v1022 = vmul.f32 %v944, 0.01
    %v1023 = vmul.f32 %v949, 0.01
    %v1024 = vmul.f32 %v954, 0.01
    %v1025 = vmul.f32 %v959, 0.01
    %v1026 = vmul.f32 %v964, 0.01
    %v1027 = vmul.f32 %v969, 0.01
    %v1028 = vmul.f32 %v974, 0.01
    %v1029 = vmul.f32 %v979, 0.01
    %v1030 = vmul.f32 %v984, 0.01
    %v1031 = vmul.f32 %v989, 0.01
    %v1032 = vmul.f32 %v994, 0.01
    %v1033 = vmul.f32 %v999, 0.01
    %v1034 = vsel %vm1002, %v924, %v1018
    %v1035 = vsel %vm1003, %v929, %v1019
    %v1036 = vsel %vm1004, %v934, %v1020
    %v1037 = vsel %vm1005, %v939, %v1021
    %v1038 = vsel %vm1006, %v944, %v1022
    %v1039 = vsel %vm1007, %v949, %v1023
    %v1040 = vsel %vm1008, %v954, %v1024
    %v1041 = vsel %vm1009, %v959, %v1025
    %v1042 = vsel %vm1010, %v964, %v1026
    %v1043 = vsel %vm1011, %v969, %v1027
    %v1044 = vsel %vm1012, %v974, %v1028
    %v1045 = vsel %vm1013, %v979, %v1029
    %v1046 = vsel %vm1014, %v984, %v1030
    %v1047 = vsel %vm1015, %v989, %v1031
    %v1048 = vsel %vm1016, %v994, %v1032
    %v1049 = vsel %vm1017, %v999, %v1033
    %v1050 = vld [vmem:[%s7] sm:$0x1]
    %v1052 = vlaneseq
    %v1053 = vshrl.u32 %v1052, 7
    %v1054 = vsub.s32 0, %v1053
    %v1055 = vrot.slane %v1050, %v1054
    %v1057 = vmul.f32 %v1034, %v1055
    %v1058 = vmul.f32 %v1035, %v1055
    %v1059 = vmul.f32 %v1036, %v1055
    %v1060 = vmul.f32 %v1037, %v1055
    %v1061 = vmul.f32 %v1038, %v1055
    %v1062 = vmul.f32 %v1039, %v1055
    %v1063 = vmul.f32 %v1040, %v1055
    %v1064 = vmul.f32 %v1041, %v1055
    %v1065 = vmul.f32 %v1042, %v1055
    %v1066 = vmul.f32 %v1043, %v1055
    %v1067 = vmul.f32 %v1044, %v1055
    %v1068 = vmul.f32 %v1045, %v1055
    %v1069 = vmul.f32 %v1046, %v1055
    %v1070 = vmul.f32 %v1047, %v1055
    %v1071 = vmul.f32 %v1048, %v1055
    %v1072 = vmul.f32 %v1049, %v1055
    %1073 = vadd.xlane.f32.xlu0 %v1057
    %v1074 = vpop.xlane.xlu0 %1073
    %1075 = vadd.xlane.f32.xlu0 %v1058
    %v1076 = vpop.xlane.xlu0 %1075
    %1077 = vadd.xlane.f32.xlu0 %v1059
    %v1078 = vpop.xlane.xlu0 %1077
    %1079 = vadd.xlane.f32.xlu0 %v1060
    %v1080 = vpop.xlane.xlu0 %1079
    %1081 = vadd.xlane.f32.xlu0 %v1061
    %v1082 = vpop.xlane.xlu0 %1081
    %1083 = vadd.xlane.f32.xlu0 %v1062
    %v1084 = vpop.xlane.xlu0 %1083
    %1085 = vadd.xlane.f32.xlu0 %v1063
    %v1086 = vpop.xlane.xlu0 %1085
    %1087 = vadd.xlane.f32.xlu0 %v1064
    %v1088 = vpop.xlane.xlu0 %1087
    %1089 = vadd.xlane.f32.xlu0 %v1065
    %v1090 = vpop.xlane.xlu0 %1089
    %1091 = vadd.xlane.f32.xlu0 %v1066
    %v1092 = vpop.xlane.xlu0 %1091
    %1093 = vadd.xlane.f32.xlu0 %v1067
    %v1094 = vpop.xlane.xlu0 %1093
    %1095 = vadd.xlane.f32.xlu0 %v1068
    %v1096 = vpop.xlane.xlu0 %1095
    %1097 = vadd.xlane.f32.xlu0 %v1069
    %v1098 = vpop.xlane.xlu0 %1097
    %1099 = vadd.xlane.f32.xlu0 %v1070
    %v1100 = vpop.xlane.xlu0 %1099
    %1101 = vadd.xlane.f32.xlu0 %v1071
    %v1102 = vpop.xlane.xlu0 %1101
    %1103 = vadd.xlane.f32.xlu0 %v1072
    %v1104 = vpop.xlane.xlu0 %1103
    %s1105 = sld [smem:[#allocation8]]
    %v1106 = vstv %s1105
    %v1107 = vadd.f32 %v1074, %v1106
    %v1108 = vadd.f32 %v1076, %v1106
    %v1109 = vadd.f32 %v1078, %v1106
    %v1110 = vadd.f32 %v1080, %v1106
    %v1111 = vadd.f32 %v1082, %v1106
    %v1112 = vadd.f32 %v1084, %v1106
    %v1113 = vadd.f32 %v1086, %v1106
    %v1114 = vadd.f32 %v1088, %v1106
    %v1115 = vadd.f32 %v1090, %v1106
    %v1116 = vadd.f32 %v1092, %v1106
    %v1117 = vadd.f32 %v1094, %v1106
    %v1118 = vadd.f32 %v1096, %v1106
    %v1119 = vadd.f32 %v1098, %v1106
    %v1120 = vadd.f32 %v1100, %v1106
    %v1121 = vadd.f32 %v1102, %v1106
    %v1122 = vadd.f32 %v1104, %v1106
    %v1139 = vlaneseq
    %v1140 = vand.u32 %v1139, 127
    %v1141 = vlaneseq
    %v1142 = vshrl.u32 %v1141, 7
    %v1143 = vsub.s32 %v1140, %v1142
    %v1144 = vrot.slane %v1107, %v1143
    %v1145 = vadd.s32 %v1140, 4294967288
    %v1146 = vlaneseq
    %v1147 = vshrl.u32 %v1146, 7
    %v1148 = vsub.s32 %v1145, %v1147
    %v1149 = vrot.slane %v1108, %v1148
    %vm1150 = vcmask 130112
    %v1151 = vsel %vm1150, %v1149, %v1144
    %v1152 = vadd.s32 %v1140, 4294967280
    %v1153 = vlaneseq
    %v1154 = vshrl.u32 %v1153, 7
    %v1155 = vsub.s32 %v1152, %v1154
    %v1156 = vrot.slane %v1109, %v1155
    %vm1157 = vcmask 195712
    %v1158 = vsel %vm1157, %v1156, %v1151
    %v1159 = vadd.s32 %v1140, 4294967272
    %v1160 = vlaneseq
    %v1161 = vshrl.u32 %v1160, 7
    %v1162 = vsub.s32 %v1159, %v1161
    %v1163 = vrot.slane %v1110, %v1162
    %vm1164 = vcmask 261312
    %v1165 = vsel %vm1164, %v1163, %v1158
    %v1166 = vadd.s32 %v1140, 4294967264
    %v1167 = vlaneseq
    %v1168 = vshrl.u32 %v1167, 7
    %v1169 = vsub.s32 %v1166, %v1168
    %v1170 = vrot.slane %v1111, %v1169
    %vm1171 = vcmask 326912
    %v1172 = vsel %vm1171, %v1170, %v1165
    %v1173 = vadd.s32 %v1140, 4294967256
    %v1174 = vlaneseq
    %v1175 = vshrl.u32 %v1174, 7
    %v1176 = vsub.s32 %v1173, %v1175
    %v1177 = vrot.slane %v1112, %v1176
    %vm1178 = vcmask 392512
    %v1179 = vsel %vm1178, %v1177, %v1172
    %v1180 = vadd.s32 %v1140, 4294967248
    %v1181 = vlaneseq
    %v1182 = vshrl.u32 %v1181, 7
    %v1183 = vsub.s32 %v1180, %v1182
    %v1184 = vrot.slane %v1113, %v1183
    %vm1185 = vcmask 458112
    %v1186 = vsel %vm1185, %v1184, %v1179
    %v1187 = vadd.s32 %v1140, 4294967240
    %v1188 = vlaneseq
    %v1189 = vshrl.u32 %v1188, 7
    %v1190 = vsub.s32 %v1187, %v1189
    %v1191 = vrot.slane %v1114, %v1190
    %vm1192 = vcmask 523712
    %v1193 = vsel %vm1192, %v1191, %v1186
    %v1194 = vadd.s32 %v1140, 4294967232
    %v1195 = vlaneseq
    %v1196 = vshrl.u32 %v1195, 7
    %v1197 = vsub.s32 %v1194, %v1196
    %v1198 = vrot.slane %v1115, %v1197
    %vm1199 = vcmask 589312
    %v1200 = vsel %vm1199, %v1198, %v1193
    %v1201 = vadd.s32 %v1140, 4294967224
    %v1202 = vlaneseq
    %v1203 = vshrl.u32 %v1202, 7
    %v1204 = vsub.s32 %v1201, %v1203
    %v1205 = vrot.slane %v1116, %v1204
    %vm1206 = vcmask 654912
    %v1207 = vsel %vm1206, %v1205, %v1200
    %v1208 = vadd.s32 %v1140, 4294967216
    %v1209 = vlaneseq
    %v1210 = vshrl.u32 %v1209, 7
    %v1211 = vsub.s32 %v1208, %v1210
    %v1212 = vrot.slane %v1117, %v1211
    %vm1213 = vcmask 720512
    %v1214 = vsel %vm1213, %v1212, %v1207
    %v1215 = vadd.s32 %v1140, 4294967208
    %v1216 = vlaneseq
    %v1217 = vshrl.u32 %v1216, 7
    %v1218 = vsub.s32 %v1215, %v1217
    %v1219 = vrot.slane %v1118, %v1218
    %vm1220 = vcmask 786112
    %v1221 = vsel %vm1220, %v1219, %v1214
    %v1222 = vadd.s32 %v1140, 4294967200
    %v1223 = vlaneseq
    %v1224 = vshrl.u32 %v1223, 7
    %v1225 = vsub.s32 %v1222, %v1224
    %v1226 = vrot.slane %v1119, %v1225
    %vm1227 = vcmask 851712
    %v1228 = vsel %vm1227, %v1226, %v1221
    %v1229 = vadd.s32 %v1140, 4294967192
    %v1230 = vlaneseq
    %v1231 = vshrl.u32 %v1230, 7
    %v1232 = vsub.s32 %v1229, %v1231
    %v1233 = vrot.slane %v1120, %v1232
    %vm1234 = vcmask 917312
    %v1235 = vsel %vm1234, %v1233, %v1228
    %v1236 = vadd.s32 %v1140, 4294967184
    %v1237 = vlaneseq
    %v1238 = vshrl.u32 %v1237, 7
    %v1239 = vsub.s32 %v1236, %v1238
    %v1240 = vrot.slane %v1121, %v1239
    %vm1241 = vcmask 982912
    %v1242 = vsel %vm1241, %v1240, %v1235
    %v1243 = vadd.s32 %v1140, 4294967176
    %v1244 = vlaneseq
    %v1245 = vshrl.u32 %v1244, 7
    %v1246 = vsub.s32 %v1243, %v1245
    %v1247 = vrot.slane %v1122, %v1246
    %vm1248 = vcmask 1048512
    %v1249 = vsel %vm1248, %v1247, %v1242
    %1251 = vst [vmem:[#allocation9] sm:$0x1] %v1249
    %s1252 = scalar_lea.vmem [#allocation2], 128
    %v1253 = vld [vmem:[%s1252] sm:$0xff]
    %v1254 = vld [vmem:[%s1252 + $0x8] sm:$0xff]
    %v1255 = vld [vmem:[%s1252 + $0x10] sm:$0xff]
    %v1256 = vld [vmem:[%s1252 + $0x18] sm:$0xff]
    %v1257 = vld [vmem:[%s1252 + $0x20] sm:$0xff]
    %v1258 = vld [vmem:[%s1252 + $0x28] sm:$0xff]
    %v1259 = vld [vmem:[%s1252 + $0x30] sm:$0xff]
    %v1260 = vld [vmem:[%s1252 + $0x38] sm:$0xff]
    %v1261 = vld [vmem:[%s1252 + $0x40] sm:$0xff]
    %v1262 = vld [vmem:[%s1252 + $0x48] sm:$0xff]
    %v1263 = vld [vmem:[%s1252 + $0x50] sm:$0xff]
    %v1264 = vld [vmem:[%s1252 + $0x58] sm:$0xff]
    %v1265 = vld [vmem:[%s1252 + $0x60] sm:$0xff]
    %v1266 = vld [vmem:[%s1252 + $0x68] sm:$0xff]
    %v1267 = vld [vmem:[%s1252 + $0x70] sm:$0xff]
    %v1268 = vld [vmem:[%s1252 + $0x78] sm:$0xff]
    %s1269 = scalar_lea.vmem %s4, 1
    %v1270 = vld [vmem:[%s1269] sm:$0x1]
    %v1272 = vlaneseq
    %v1273 = vshrl.u32 %v1272, 7
    %v1274 = vsub.s32 0, %v1273
    %v1275 = vrot.slane %v1270, %v1274
    %1277 = vmatprep.subr.mxu0 0.0
    %1278 = vmatpush1.msra.mxu0 %v1268
    %1279 = vmatprep.subr.mxu0 0.0
    %1280 = vmatpush1.msra.mxu0 %v1267
    %1281 = vmatprep.subr.mxu0 0.0
    %1282 = vmatpush1.msra.mxu0 %v1266
    %1283 = vmatprep.subr.mxu0 0.0
    %1284 = vmatpush1.msra.mxu0 %v1265
    %1285 = vmatprep.subr.mxu0 0.0
    %1286 = vmatpush1.msra.mxu0 %v1264
    %1287 = vmatprep.subr.mxu0 0.0
    %1288 = vmatpush1.msra.mxu0 %v1263
    %1289 = vmatprep.subr.mxu0 0.0
    %1290 = vmatpush1.msra.mxu0 %v1262
    %1291 = vmatprep.subr.mxu0 0.0
    %1292 = vmatpush1.msra.mxu0 %v1261
    %1293 = vmatprep.subr.mxu0 0.0
    %1294 = vmatpush1.msra.mxu0 %v1260
    %1295 = vmatprep.subr.mxu0 0.0
    %1296 = vmatpush1.msra.mxu0 %v1259
    %1297 = vmatprep.subr.mxu0 0.0
    %1298 = vmatpush1.msra.mxu0 %v1258
    %1299 = vmatprep.subr.mxu0 0.0
    %1300 = vmatpush1.msra.mxu0 %v1257
    %1301 = vmatprep.subr.mxu0 0.0
    %1302 = vmatpush1.msra.mxu0 %v1256
    %1303 = vmatprep.subr.mxu0 0.0
    %1304 = vmatpush1.msra.mxu0 %v1255
    %1305 = vmatprep.subr.mxu0 0.0
    %1306 = vmatpush1.msra.mxu0 %v1254
    %1307 = vmatprep.subr.mxu0 0.0
    %1308 = vmatpush1.msra.mxu0 %v1253
    %1309 = vmatprep.subr.mxu0 0.0
    %1310 = vmatpush2.msra.mxu0 0.0
    %1311 = vmatprep.subr.mxu0 0.0
    %1312 = vmatpush2.msra.mxu0 0.0
    %1313 = vmatprep.subr.mxu0 0.0
    %1314 = vmatpush2.msra.mxu0 0.0
    %1315 = vmatprep.subr.mxu0 0.0
    %1316 = vmatpush2.msra.mxu0 0.0
    %1317 = vmatprep.subr.mxu0 0.0
    %1318 = vmatpush2.msra.mxu0 0.0
    %1319 = vmatprep.subr.mxu0 0.0
    %1320 = vmatpush2.msra.mxu0 0.0
    %1321 = vmatprep.subr.mxu0 0.0
    %1322 = vmatpush2.msra.mxu0 0.0
    %1323 = vmatprep.subr.mxu0 0.0
    %1324 = vmatpush2.msra.mxu0 0.0
    %1325 = vmatprep.subr.mxu0 0.0
    %1326 = vmatpush2.msra.mxu0 0.0
    %1327 = vmatprep.subr.mxu0 0.0
    %1328 = vmatpush2.msra.mxu0 0.0
    %1329 = vmatprep.subr.mxu0 0.0
    %1330 = vmatpush2.msra.mxu0 0.0
    %1331 = vmatprep.subr.mxu0 0.0
    %1332 = vmatpush2.msra.mxu0 0.0
    %1333 = vmatprep.subr.mxu0 0.0
    %1334 = vmatpush2.msra.mxu0 0.0
    %1335 = vmatprep.subr.mxu0 0.0
    %1336 = vmatpush2.msra.mxu0 0.0
    %1337 = vmatprep.subr.mxu0 0.0
    %1338 = vmatpush2.msra.mxu0 0.0
    %1339 = vmatprep.subr.mxu0 0.0
    %1340 = vmatpush2.msra.mxu0 0.0
    %1341 = vmatprep.mubr.f32.mxu0 0.0
    %1342 = vmatmul.mubr.f32.gmra.mxu0 %v571
    %v1343 = vpop.f32.mrf.mxu0
    %v1344 = vadd.f32 %v1275, %v1343
    %v1345 = vpop.f32.mrf.mxu0
    %1346 = vmatprep.mubr.f32.mxu0 0.0
    %1347 = vmatmul.mubr.f32.gmra.mxu0 %v574
    %v1348 = vpop.f32.mrf.mxu0
    %v1349 = vadd.f32 %v1275, %v1348
    %v1350 = vpop.f32.mrf.mxu0
    %1351 = vmatprep.mubr.f32.mxu0 0.0
    %1352 = vmatmul.mubr.f32.gmra.mxu0 %v577
    %v1353 = vpop.f32.mrf.mxu0
    %v1354 = vadd.f32 %v1275, %v1353
    %v1355 = vpop.f32.mrf.mxu0
    %1356 = vmatprep.mubr.f32.mxu0 0.0
    %1357 = vmatmul.mubr.f32.gmra.mxu0 %v580
    %v1358 = vpop.f32.mrf.mxu0
    %v1359 = vadd.f32 %v1275, %v1358
    %v1360 = vpop.f32.mrf.mxu0
    %1361 = vmatprep.mubr.f32.mxu0 0.0
    %1362 = vmatmul.mubr.f32.gmra.mxu0 %v583
    %v1363 = vpop.f32.mrf.mxu0
    %v1364 = vadd.f32 %v1275, %v1363
    %v1365 = vpop.f32.mrf.mxu0
    %1366 = vmatprep.mubr.f32.mxu0 0.0
    %1367 = vmatmul.mubr.f32.gmra.mxu0 %v586
    %v1368 = vpop.f32.mrf.mxu0
    %v1369 = vadd.f32 %v1275, %v1368
    %v1370 = vpop.f32.mrf.mxu0
    %1371 = vmatprep.mubr.f32.mxu0 0.0
    %1372 = vmatmul.mubr.f32.gmra.mxu0 %v589
    %v1373 = vpop.f32.mrf.mxu0
    %v1374 = vadd.f32 %v1275, %v1373
    %v1375 = vpop.f32.mrf.mxu0
    %1376 = vmatprep.mubr.f32.mxu0 0.0
    %1377 = vmatmul.mubr.f32.gmra.mxu0 %v592
    %v1378 = vpop.f32.mrf.mxu0
    %v1379 = vadd.f32 %v1275, %v1378
    %v1380 = vpop.f32.mrf.mxu0
    %1381 = vmatprep.mubr.f32.mxu0 0.0
    %1382 = vmatmul.mubr.f32.gmra.mxu0 %v595
    %v1383 = vpop.f32.mrf.mxu0
    %v1384 = vadd.f32 %v1275, %v1383
    %v1385 = vpop.f32.mrf.mxu0
    %1386 = vmatprep.mubr.f32.mxu0 0.0
    %1387 = vmatmul.mubr.f32.gmra.mxu0 %v598
    %v1388 = vpop.f32.mrf.mxu0
    %v1389 = vadd.f32 %v1275, %v1388
    %v1390 = vpop.f32.mrf.mxu0
    %1391 = vmatprep.mubr.f32.mxu0 0.0
    %1392 = vmatmul.mubr.f32.gmra.mxu0 %v601
    %v1393 = vpop.f32.mrf.mxu0
    %v1394 = vadd.f32 %v1275, %v1393
    %v1395 = vpop.f32.mrf.mxu0
    %1396 = vmatprep.mubr.f32.mxu0 0.0
    %1397 = vmatmul.mubr.f32.gmra.mxu0 %v604
    %v1398 = vpop.f32.mrf.mxu0
    %v1399 = vadd.f32 %v1275, %v1398
    %v1400 = vpop.f32.mrf.mxu0
    %1401 = vmatprep.mubr.f32.mxu0 0.0
    %1402 = vmatmul.mubr.f32.gmra.mxu0 %v607
    %v1403 = vpop.f32.mrf.mxu0
    %v1404 = vadd.f32 %v1275, %v1403
    %v1405 = vpop.f32.mrf.mxu0
    %1406 = vmatprep.mubr.f32.mxu0 0.0
    %1407 = vmatmul.mubr.f32.gmra.mxu0 %v610
    %v1408 = vpop.f32.mrf.mxu0
    %v1409 = vadd.f32 %v1275, %v1408
    %v1410 = vpop.f32.mrf.mxu0
    %1411 = vmatprep.mubr.f32.mxu0 0.0
    %1412 = vmatmul.mubr.f32.gmra.mxu0 %v613
    %v1413 = vpop.f32.mrf.mxu0
    %v1414 = vadd.f32 %v1275, %v1413
    %v1415 = vpop.f32.mrf.mxu0
    %1416 = vmatprep.mubr.f32.mxu0 0.0
    %1417 = vmatmul.mubr.f32.gmra.mxu0 %v616
    %v1418 = vpop.f32.mrf.mxu0
    %v1419 = vadd.f32 %v1275, %v1418
    %v1420 = vpop.f32.mrf.mxu0
    %1421 = vdwg.mxu0
    %vm1422 = vcmp.gt.f32.partialorder %v1344, 0.0
    %vm1423 = vcmp.gt.f32.partialorder %v1349, 0.0
    %vm1424 = vcmp.gt.f32.partialorder %v1354, 0.0
    %vm1425 = vcmp.gt.f32.partialorder %v1359, 0.0
    %vm1426 = vcmp.gt.f32.partialorder %v1364, 0.0
    %vm1427 = vcmp.gt.f32.partialorder %v1369, 0.0
    %vm1428 = vcmp.gt.f32.partialorder %v1374, 0.0
    %vm1429 = vcmp.gt.f32.partialorder %v1379, 0.0
    %vm1430 = vcmp.gt.f32.partialorder %v1384, 0.0
    %vm1431 = vcmp.gt.f32.partialorder %v1389, 0.0
    %vm1432 = vcmp.gt.f32.partialorder %v1394, 0.0
    %vm1433 = vcmp.gt.f32.partialorder %v1399, 0.0
    %vm1434 = vcmp.gt.f32.partialorder %v1404, 0.0
    %vm1435 = vcmp.gt.f32.partialorder %v1409, 0.0
    %vm1436 = vcmp.gt.f32.partialorder %v1414, 0.0
    %vm1437 = vcmp.gt.f32.partialorder %v1419, 0.0
    %v1438 = vmul.f32 %v1344, 0.01
    %v1439 = vmul.f32 %v1349, 0.01
    %v1440 = vmul.f32 %v1354, 0.01
    %v1441 = vmul.f32 %v1359, 0.01
    %v1442 = vmul.f32 %v1364, 0.01
    %v1443 = vmul.f32 %v1369, 0.01
    %v1444 = vmul.f32 %v1374, 0.01
    %v1445 = vmul.f32 %v1379, 0.01
    %v1446 = vmul.f32 %v1384, 0.01
    %v1447 = vmul.f32 %v1389, 0.01
    %v1448 = vmul.f32 %v1394, 0.01
    %v1449 = vmul.f32 %v1399, 0.01
    %v1450 = vmul.f32 %v1404, 0.01
    %v1451 = vmul.f32 %v1409, 0.01
    %v1452 = vmul.f32 %v1414, 0.01
    %v1453 = vmul.f32 %v1419, 0.01
    %v1454 = vsel %vm1422, %v1344, %v1438
    %v1455 = vsel %vm1423, %v1349, %v1439
    %v1456 = vsel %vm1424, %v1354, %v1440
    %v1457 = vsel %vm1425, %v1359, %v1441
    %v1458 = vsel %vm1426, %v1364, %v1442
    %v1459 = vsel %vm1427, %v1369, %v1443
    %v1460 = vsel %vm1428, %v1374, %v1444
    %v1461 = vsel %vm1429, %v1379, %v1445
    %v1462 = vsel %vm1430, %v1384, %v1446
    %v1463 = vsel %vm1431, %v1389, %v1447
    %v1464 = vsel %vm1432, %v1394, %v1448
    %v1465 = vsel %vm1433, %v1399, %v1449
    %v1466 = vsel %vm1434, %v1404, %v1450
    %v1467 = vsel %vm1435, %v1409, %v1451
    %v1468 = vsel %vm1436, %v1414, %v1452
    %v1469 = vsel %vm1437, %v1419, %v1453
    %s1470 = scalar_lea.vmem [#allocation6], 128
    %v1471 = vld [vmem:[%s1470] sm:$0xff]
    %v1472 = vld [vmem:[%s1470 + $0x8] sm:$0xff]
    %v1473 = vld [vmem:[%s1470 + $0x10] sm:$0xff]
    %v1474 = vld [vmem:[%s1470 + $0x18] sm:$0xff]
    %v1475 = vld [vmem:[%s1470 + $0x20] sm:$0xff]
    %v1476 = vld [vmem:[%s1470 + $0x28] sm:$0xff]
    %v1477 = vld [vmem:[%s1470 + $0x30] sm:$0xff]
    %v1478 = vld [vmem:[%s1470 + $0x38] sm:$0xff]
    %v1479 = vld [vmem:[%s1470 + $0x40] sm:$0xff]
    %v1480 = vld [vmem:[%s1470 + $0x48] sm:$0xff]
    %v1481 = vld [vmem:[%s1470 + $0x50] sm:$0xff]
    %v1482 = vld [vmem:[%s1470 + $0x58] sm:$0xff]
    %v1483 = vld [vmem:[%s1470 + $0x60] sm:$0xff]
    %v1484 = vld [vmem:[%s1470 + $0x68] sm:$0xff]
    %v1485 = vld [vmem:[%s1470 + $0x70] sm:$0xff]
    %v1486 = vld [vmem:[%s1470 + $0x78] sm:$0xff]
    %s1487 = scalar_lea.vmem %s6, 1
    %v1488 = vld [vmem:[%s1487] sm:$0x1]
    %v1490 = vlaneseq
    %v1491 = vshrl.u32 %v1490, 7
    %v1492 = vsub.s32 0, %v1491
    %v1493 = vrot.slane %v1488, %v1492
    %1495 = vmatprep.subr.mxu0 0.0
    %1496 = vmatpush1.msra.mxu0 %v1486
    %1497 = vmatprep.subr.mxu0 0.0
    %1498 = vmatpush1.msra.mxu0 %v1485
    %1499 = vmatprep.subr.mxu0 0.0
    %1500 = vmatpush1.msra.mxu0 %v1484
    %1501 = vmatprep.subr.mxu0 0.0
    %1502 = vmatpush1.msra.mxu0 %v1483
    %1503 = vmatprep.subr.mxu0 0.0
    %1504 = vmatpush1.msra.mxu0 %v1482
    %1505 = vmatprep.subr.mxu0 0.0
    %1506 = vmatpush1.msra.mxu0 %v1481
    %1507 = vmatprep.subr.mxu0 0.0
    %1508 = vmatpush1.msra.mxu0 %v1480
    %1509 = vmatprep.subr.mxu0 0.0
    %1510 = vmatpush1.msra.mxu0 %v1479
    %1511 = vmatprep.subr.mxu0 0.0
    %1512 = vmatpush1.msra.mxu0 %v1478
    %1513 = vmatprep.subr.mxu0 0.0
    %1514 = vmatpush1.msra.mxu0 %v1477
    %1515 = vmatprep.subr.mxu0 0.0
    %1516 = vmatpush1.msra.mxu0 %v1476
    %1517 = vmatprep.subr.mxu0 0.0
    %1518 = vmatpush1.msra.mxu0 %v1475
    %1519 = vmatprep.subr.mxu0 0.0
    %1520 = vmatpush1.msra.mxu0 %v1474
    %1521 = vmatprep.subr.mxu0 0.0
    %1522 = vmatpush1.msra.mxu0 %v1473
    %1523 = vmatprep.subr.mxu0 0.0
    %1524 = vmatpush1.msra.mxu0 %v1472
    %1525 = vmatprep.subr.mxu0 0.0
    %1526 = vmatpush1.msra.mxu0 %v1471
    %1527 = vmatprep.subr.mxu0 0.0
    %1528 = vmatpush2.msra.mxu0 0.0
    %1529 = vmatprep.subr.mxu0 0.0
    %1530 = vmatpush2.msra.mxu0 0.0
    %1531 = vmatprep.subr.mxu0 0.0
    %1532 = vmatpush2.msra.mxu0 0.0
    %1533 = vmatprep.subr.mxu0 0.0
    %1534 = vmatpush2.msra.mxu0 0.0
    %1535 = vmatprep.subr.mxu0 0.0
    %1536 = vmatpush2.msra.mxu0 0.0
    %1537 = vmatprep.subr.mxu0 0.0
    %1538 = vmatpush2.msra.mxu0 0.0
    %1539 = vmatprep.subr.mxu0 0.0
    %1540 = vmatpush2.msra.mxu0 0.0
    %1541 = vmatprep.subr.mxu0 0.0
    %1542 = vmatpush2.msra.mxu0 0.0
    %1543 = vmatprep.subr.mxu0 0.0
    %1544 = vmatpush2.msra.mxu0 0.0
    %1545 = vmatprep.subr.mxu0 0.0
    %1546 = vmatpush2.msra.mxu0 0.0
    %1547 = vmatprep.subr.mxu0 0.0
    %1548 = vmatpush2.msra.mxu0 0.0
    %1549 = vmatprep.subr.mxu0 0.0
    %1550 = vmatpush2.msra.mxu0 0.0
    %1551 = vmatprep.subr.mxu0 0.0
    %1552 = vmatpush2.msra.mxu0 0.0
    %1553 = vmatprep.subr.mxu0 0.0
    %1554 = vmatpush2.msra.mxu0 0.0
    %1555 = vmatprep.subr.mxu0 0.0
    %1556 = vmatpush2.msra.mxu0 0.0
    %1557 = vmatprep.subr.mxu0 0.0
    %1558 = vmatpush2.msra.mxu0 0.0
    %1559 = vmatprep.mubr.f32.mxu0 0.0
    %1560 = vmatmul.mubr.f32.gmra.mxu0 %v1454
    %v1561 = vpop.f32.mrf.mxu0
    %v1562 = vadd.f32 %v1493, %v1561
    %v1563 = vpop.f32.mrf.mxu0
    %1564 = vmatprep.mubr.f32.mxu0 0.0
    %1565 = vmatmul.mubr.f32.gmra.mxu0 %v1455
    %v1566 = vpop.f32.mrf.mxu0
    %v1567 = vadd.f32 %v1493, %v1566
    %v1568 = vpop.f32.mrf.mxu0
    %1569 = vmatprep.mubr.f32.mxu0 0.0
    %1570 = vmatmul.mubr.f32.gmra.mxu0 %v1456
    %v1571 = vpop.f32.mrf.mxu0
    %v1572 = vadd.f32 %v1493, %v1571
    %v1573 = vpop.f32.mrf.mxu0
    %1574 = vmatprep.mubr.f32.mxu0 0.0
    %1575 = vmatmul.mubr.f32.gmra.mxu0 %v1457
    %v1576 = vpop.f32.mrf.mxu0
    %v1577 = vadd.f32 %v1493, %v1576
    %v1578 = vpop.f32.mrf.mxu0
    %1579 = vmatprep.mubr.f32.mxu0 0.0
    %1580 = vmatmul.mubr.f32.gmra.mxu0 %v1458
    %v1581 = vpop.f32.mrf.mxu0
    %v1582 = vadd.f32 %v1493, %v1581
    %v1583 = vpop.f32.mrf.mxu0
    %1584 = vmatprep.mubr.f32.mxu0 0.0
    %1585 = vmatmul.mubr.f32.gmra.mxu0 %v1459
    %v1586 = vpop.f32.mrf.mxu0
    %v1587 = vadd.f32 %v1493, %v1586
    %v1588 = vpop.f32.mrf.mxu0
    %1589 = vmatprep.mubr.f32.mxu0 0.0
    %1590 = vmatmul.mubr.f32.gmra.mxu0 %v1460
    %v1591 = vpop.f32.mrf.mxu0
    %v1592 = vadd.f32 %v1493, %v1591
    %v1593 = vpop.f32.mrf.mxu0
    %1594 = vmatprep.mubr.f32.mxu0 0.0
    %1595 = vmatmul.mubr.f32.gmra.mxu0 %v1461
    %v1596 = vpop.f32.mrf.mxu0
    %v1597 = vadd.f32 %v1493, %v1596
    %v1598 = vpop.f32.mrf.mxu0
    %1599 = vmatprep.mubr.f32.mxu0 0.0
    %1600 = vmatmul.mubr.f32.gmra.mxu0 %v1462
    %v1601 = vpop.f32.mrf.mxu0
    %v1602 = vadd.f32 %v1493, %v1601
    %v1603 = vpop.f32.mrf.mxu0
    %1604 = vmatprep.mubr.f32.mxu0 0.0
    %1605 = vmatmul.mubr.f32.gmra.mxu0 %v1463
    %v1606 = vpop.f32.mrf.mxu0
    %v1607 = vadd.f32 %v1493, %v1606
    %v1608 = vpop.f32.mrf.mxu0
    %1609 = vmatprep.mubr.f32.mxu0 0.0
    %1610 = vmatmul.mubr.f32.gmra.mxu0 %v1464
    %v1611 = vpop.f32.mrf.mxu0
    %v1612 = vadd.f32 %v1493, %v1611
    %v1613 = vpop.f32.mrf.mxu0
    %1614 = vmatprep.mubr.f32.mxu0 0.0
    %1615 = vmatmul.mubr.f32.gmra.mxu0 %v1465
    %v1616 = vpop.f32.mrf.mxu0
    %v1617 = vadd.f32 %v1493, %v1616
    %v1618 = vpop.f32.mrf.mxu0
    %1619 = vmatprep.mubr.f32.mxu0 0.0
    %1620 = vmatmul.mubr.f32.gmra.mxu0 %v1466
    %v1621 = vpop.f32.mrf.mxu0
    %v1622 = vadd.f32 %v1493, %v1621
    %v1623 = vpop.f32.mrf.mxu0
    %1624 = vmatprep.mubr.f32.mxu0 0.0
    %1625 = vmatmul.mubr.f32.gmra.mxu0 %v1467
    %v1626 = vpop.f32.mrf.mxu0
    %v1627 = vadd.f32 %v1493, %v1626
    %v1628 = vpop.f32.mrf.mxu0
    %1629 = vmatprep.mubr.f32.mxu0 0.0
    %1630 = vmatmul.mubr.f32.gmra.mxu0 %v1468
    %v1631 = vpop.f32.mrf.mxu0
    %v1632 = vadd.f32 %v1493, %v1631
    %v1633 = vpop.f32.mrf.mxu0
    %1634 = vmatprep.mubr.f32.mxu0 0.0
    %1635 = vmatmul.mubr.f32.gmra.mxu0 %v1469
    %v1636 = vpop.f32.mrf.mxu0
    %v1637 = vadd.f32 %v1493, %v1636
    %v1638 = vpop.f32.mrf.mxu0
    %1639 = vdwg.mxu0
    %vm1640 = vcmp.gt.f32.partialorder %v1562, 0.0
    %vm1641 = vcmp.gt.f32.partialorder %v1567, 0.0
    %vm1642 = vcmp.gt.f32.partialorder %v1572, 0.0
    %vm1643 = vcmp.gt.f32.partialorder %v1577, 0.0
    %vm1644 = vcmp.gt.f32.partialorder %v1582, 0.0
    %vm1645 = vcmp.gt.f32.partialorder %v1587, 0.0
    %vm1646 = vcmp.gt.f32.partialorder %v1592, 0.0
    %vm1647 = vcmp.gt.f32.partialorder %v1597, 0.0
    %vm1648 = vcmp.gt.f32.partialorder %v1602, 0.0
    %vm1649 = vcmp.gt.f32.partialorder %v1607, 0.0
    %vm1650 = vcmp.gt.f32.partialorder %v1612, 0.0
    %vm1651 = vcmp.gt.f32.partialorder %v1617, 0.0
    %vm1652 = vcmp.gt.f32.partialorder %v1622, 0.0
    %vm1653 = vcmp.gt.f32.partialorder %v1627, 0.0
    %vm1654 = vcmp.gt.f32.partialorder %v1632, 0.0
    %vm1655 = vcmp.gt.f32.partialorder %v1637, 0.0
    %v1656 = vmul.f32 %v1562, 0.01
    %v1657 = vmul.f32 %v1567, 0.01
    %v1658 = vmul.f32 %v1572, 0.01
    %v1659 = vmul.f32 %v1577, 0.01
    %v1660 = vmul.f32 %v1582, 0.01
    %v1661 = vmul.f32 %v1587, 0.01
    %v1662 = vmul.f32 %v1592, 0.01
    %v1663 = vmul.f32 %v1597, 0.01
    %v1664 = vmul.f32 %v1602, 0.01
    %v1665 = vmul.f32 %v1607, 0.01
    %v1666 = vmul.f32 %v1612, 0.01
    %v1667 = vmul.f32 %v1617, 0.01
    %v1668 = vmul.f32 %v1622, 0.01
    %v1669 = vmul.f32 %v1627, 0.01
    %v1670 = vmul.f32 %v1632, 0.01
    %v1671 = vmul.f32 %v1637, 0.01
    %v1672 = vsel %vm1640, %v1562, %v1656
    %v1673 = vsel %vm1641, %v1567, %v1657
    %v1674 = vsel %vm1642, %v1572, %v1658
    %v1675 = vsel %vm1643, %v1577, %v1659
    %v1676 = vsel %vm1644, %v1582, %v1660
    %v1677 = vsel %vm1645, %v1587, %v1661
    %v1678 = vsel %vm1646, %v1592, %v1662
    %v1679 = vsel %vm1647, %v1597, %v1663
    %v1680 = vsel %vm1648, %v1602, %v1664
    %v1681 = vsel %vm1649, %v1607, %v1665
    %v1682 = vsel %vm1650, %v1612, %v1666
    %v1683 = vsel %vm1651, %v1617, %v1667
    %v1684 = vsel %vm1652, %v1622, %v1668
    %v1685 = vsel %vm1653, %v1627, %v1669
    %v1686 = vsel %vm1654, %v1632, %v1670
    %v1687 = vsel %vm1655, %v1637, %v1671
    %s1688 = scalar_lea.vmem %s7, 1
    %v1689 = vld [vmem:[%s1688] sm:$0x1]
    %v1691 = vlaneseq
    %v1692 = vshrl.u32 %v1691, 7
    %v1693 = vsub.s32 0, %v1692
    %v1694 = vrot.slane %v1689, %v1693
    %v1696 = vmul.f32 %v1672, %v1694
    %v1697 = vmul.f32 %v1673, %v1694
    %v1698 = vmul.f32 %v1674, %v1694
    %v1699 = vmul.f32 %v1675, %v1694
    %v1700 = vmul.f32 %v1676, %v1694
    %v1701 = vmul.f32 %v1677, %v1694
    %v1702 = vmul.f32 %v1678, %v1694
    %v1703 = vmul.f32 %v1679, %v1694
    %v1704 = vmul.f32 %v1680, %v1694
    %v1705 = vmul.f32 %v1681, %v1694
    %v1706 = vmul.f32 %v1682, %v1694
    %v1707 = vmul.f32 %v1683, %v1694
    %v1708 = vmul.f32 %v1684, %v1694
    %v1709 = vmul.f32 %v1685, %v1694
    %v1710 = vmul.f32 %v1686, %v1694
    %v1711 = vmul.f32 %v1687, %v1694
    %1712 = vadd.xlane.f32.xlu0 %v1696
    %v1713 = vpop.xlane.xlu0 %1712
    %1714 = vadd.xlane.f32.xlu0 %v1697
    %v1715 = vpop.xlane.xlu0 %1714
    %1716 = vadd.xlane.f32.xlu0 %v1698
    %v1717 = vpop.xlane.xlu0 %1716
    %1718 = vadd.xlane.f32.xlu0 %v1699
    %v1719 = vpop.xlane.xlu0 %1718
    %1720 = vadd.xlane.f32.xlu0 %v1700
    %v1721 = vpop.xlane.xlu0 %1720
    %1722 = vadd.xlane.f32.xlu0 %v1701
    %v1723 = vpop.xlane.xlu0 %1722
    %1724 = vadd.xlane.f32.xlu0 %v1702
    %v1725 = vpop.xlane.xlu0 %1724
    %1726 = vadd.xlane.f32.xlu0 %v1703
    %v1727 = vpop.xlane.xlu0 %1726
    %1728 = vadd.xlane.f32.xlu0 %v1704
    %v1729 = vpop.xlane.xlu0 %1728
    %1730 = vadd.xlane.f32.xlu0 %v1705
    %v1731 = vpop.xlane.xlu0 %1730
    %1732 = vadd.xlane.f32.xlu0 %v1706
    %v1733 = vpop.xlane.xlu0 %1732
    %1734 = vadd.xlane.f32.xlu0 %v1707
    %v1735 = vpop.xlane.xlu0 %1734
    %1736 = vadd.xlane.f32.xlu0 %v1708
    %v1737 = vpop.xlane.xlu0 %1736
    %1738 = vadd.xlane.f32.xlu0 %v1709
    %v1739 = vpop.xlane.xlu0 %1738
    %1740 = vadd.xlane.f32.xlu0 %v1710
    %v1741 = vpop.xlane.xlu0 %1740
    %1742 = vadd.xlane.f32.xlu0 %v1711
    %v1743 = vpop.xlane.xlu0 %1742
    %s1744 = sld [smem:[#allocation8 + $0x1]]
    %v1745 = vstv %s1744
    %v1746 = vadd.f32 %v1713, %v1745
    %v1747 = vadd.f32 %v1715, %v1745
    %v1748 = vadd.f32 %v1717, %v1745
    %v1749 = vadd.f32 %v1719, %v1745
    %v1750 = vadd.f32 %v1721, %v1745
    %v1751 = vadd.f32 %v1723, %v1745
    %v1752 = vadd.f32 %v1725, %v1745
    %v1753 = vadd.f32 %v1727, %v1745
    %v1754 = vadd.f32 %v1729, %v1745
    %v1755 = vadd.f32 %v1731, %v1745
    %v1756 = vadd.f32 %v1733, %v1745
    %v1757 = vadd.f32 %v1735, %v1745
    %v1758 = vadd.f32 %v1737, %v1745
    %v1759 = vadd.f32 %v1739, %v1745
    %v1760 = vadd.f32 %v1741, %v1745
    %v1761 = vadd.f32 %v1743, %v1745
    %v1778 = vlaneseq
    %v1779 = vshrl.u32 %v1778, 7
    %v1780 = vsub.s32 %v1140, %v1779
    %v1781 = vrot.slane %v1746, %v1780
    %v1782 = vlaneseq
    %v1783 = vshrl.u32 %v1782, 7
    %v1784 = vsub.s32 %v1145, %v1783
    %v1785 = vrot.slane %v1747, %v1784
    %v1786 = vsel %vm1150, %v1785, %v1781
    %v1787 = vlaneseq
    %v1788 = vshrl.u32 %v1787, 7
    %v1789 = vsub.s32 %v1152, %v1788
    %v1790 = vrot.slane %v1748, %v1789
    %v1791 = vsel %vm1157, %v1790, %v1786
    %v1792 = vlaneseq
    %v1793 = vshrl.u32 %v1792, 7
    %v1794 = vsub.s32 %v1159, %v1793
    %v1795 = vrot.slane %v1749, %v1794
    %v1796 = vsel %vm1164, %v1795, %v1791
    %v1797 = vlaneseq
    %v1798 = vshrl.u32 %v1797, 7
    %v1799 = vsub.s32 %v1166, %v1798
    %v1800 = vrot.slane %v1750, %v1799
    %v1801 = vsel %vm1171, %v1800, %v1796
    %v1802 = vlaneseq
    %v1803 = vshrl.u32 %v1802, 7
    %v1804 = vsub.s32 %v1173, %v1803
    %v1805 = vrot.slane %v1751, %v1804
    %v1806 = vsel %vm1178, %v1805, %v1801
    %v1807 = vlaneseq
    %v1808 = vshrl.u32 %v1807, 7
    %v1809 = vsub.s32 %v1180, %v1808
    %v1810 = vrot.slane %v1752, %v1809
    %v1811 = vsel %vm1185, %v1810, %v1806
    %v1812 = vlaneseq
    %v1813 = vshrl.u32 %v1812, 7
    %v1814 = vsub.s32 %v1187, %v1813
    %v1815 = vrot.slane %v1753, %v1814
    %v1816 = vsel %vm1192, %v1815, %v1811
    %v1817 = vlaneseq
    %v1818 = vshrl.u32 %v1817, 7
    %v1819 = vsub.s32 %v1194, %v1818
    %v1820 = vrot.slane %v1754, %v1819
    %v1821 = vsel %vm1199, %v1820, %v1816
    %v1822 = vlaneseq
    %v1823 = vshrl.u32 %v1822, 7
    %v1824 = vsub.s32 %v1201, %v1823
    %v1825 = vrot.slane %v1755, %v1824
    %v1826 = vsel %vm1206, %v1825, %v1821
    %v1827 = vlaneseq
    %v1828 = vshrl.u32 %v1827, 7
    %v1829 = vsub.s32 %v1208, %v1828
    %v1830 = vrot.slane %v1756, %v1829
    %v1831 = vsel %vm1213, %v1830, %v1826
    %v1832 = vlaneseq
    %v1833 = vshrl.u32 %v1832, 7
    %v1834 = vsub.s32 %v1215, %v1833
    %v1835 = vrot.slane %v1757, %v1834
    %v1836 = vsel %vm1220, %v1835, %v1831
    %v1837 = vlaneseq
    %v1838 = vshrl.u32 %v1837, 7
    %v1839 = vsub.s32 %v1222, %v1838
    %v1840 = vrot.slane %v1758, %v1839
    %v1841 = vsel %vm1227, %v1840, %v1836
    %v1842 = vlaneseq
    %v1843 = vshrl.u32 %v1842, 7
    %v1844 = vsub.s32 %v1229, %v1843
    %v1845 = vrot.slane %v1759, %v1844
    %v1846 = vsel %vm1234, %v1845, %v1841
    %v1847 = vlaneseq
    %v1848 = vshrl.u32 %v1847, 7
    %v1849 = vsub.s32 %v1236, %v1848
    %v1850 = vrot.slane %v1760, %v1849
    %v1851 = vsel %vm1241, %v1850, %v1846
    %v1852 = vlaneseq
    %v1853 = vshrl.u32 %v1852, 7
    %v1854 = vsub.s32 %v1243, %v1853
    %v1855 = vrot.slane %v1761, %v1854
    %v1856 = vsel %vm1248, %v1855, %v1851
    %1858 = vst [vmem:[#allocation9 + $0x1] sm:$0x1] %v1856
    %s1859 = scalar_lea.vmem [#allocation2], 256
    %v1860 = vld [vmem:[%s1859] sm:$0xff]
    %v1861 = vld [vmem:[%s1859 + $0x8] sm:$0xff]
    %v1862 = vld [vmem:[%s1859 + $0x10] sm:$0xff]
    %v1863 = vld [vmem:[%s1859 + $0x18] sm:$0xff]
    %v1864 = vld [vmem:[%s1859 + $0x20] sm:$0xff]
    %v1865 = vld [vmem:[%s1859 + $0x28] sm:$0xff]
    %v1866 = vld [vmem:[%s1859 + $0x30] sm:$0xff]
    %v1867 = vld [vmem:[%s1859 + $0x38] sm:$0xff]
    %v1868 = vld [vmem:[%s1859 + $0x40] sm:$0xff]
    %v1869 = vld [vmem:[%s1859 + $0x48] sm:$0xff]
    %v1870 = vld [vmem:[%s1859 + $0x50] sm:$0xff]
    %v1871 = vld [vmem:[%s1859 + $0x58] sm:$0xff]
    %v1872 = vld [vmem:[%s1859 + $0x60] sm:$0xff]
    %v1873 = vld [vmem:[%s1859 + $0x68] sm:$0xff]
    %v1874 = vld [vmem:[%s1859 + $0x70] sm:$0xff]
    %v1875 = vld [vmem:[%s1859 + $0x78] sm:$0xff]
    %s1876 = scalar_lea.vmem %s4, 2
    %v1877 = vld [vmem:[%s1876] sm:$0x1]
    %v1879 = vlaneseq
    %v1880 = vshrl.u32 %v1879, 7
    %v1881 = vsub.s32 0, %v1880
    %v1882 = vrot.slane %v1877, %v1881
    %1884 = vmatprep.subr.mxu0 0.0
    %1885 = vmatpush1.msra.mxu0 %v1875
    %1886 = vmatprep.subr.mxu0 0.0
    %1887 = vmatpush1.msra.mxu0 %v1874
    %1888 = vmatprep.subr.mxu0 0.0
    %1889 = vmatpush1.msra.mxu0 %v1873
    %1890 = vmatprep.subr.mxu0 0.0
    %1891 = vmatpush1.msra.mxu0 %v1872
    %1892 = vmatprep.subr.mxu0 0.0
    %1893 = vmatpush1.msra.mxu0 %v1871
    %1894 = vmatprep.subr.mxu0 0.0
    %1895 = vmatpush1.msra.mxu0 %v1870
    %1896 = vmatprep.subr.mxu0 0.0
    %1897 = vmatpush1.msra.mxu0 %v1869
    %1898 = vmatprep.subr.mxu0 0.0
    %1899 = vmatpush1.msra.mxu0 %v1868
    %1900 = vmatprep.subr.mxu0 0.0
    %1901 = vmatpush1.msra.mxu0 %v1867
    %1902 = vmatprep.subr.mxu0 0.0
    %1903 = vmatpush1.msra.mxu0 %v1866
    %1904 = vmatprep.subr.mxu0 0.0
    %1905 = vmatpush1.msra.mxu0 %v1865
    %1906 = vmatprep.subr.mxu0 0.0
    %1907 = vmatpush1.msra.mxu0 %v1864
    %1908 = vmatprep.subr.mxu0 0.0
    %1909 = vmatpush1.msra.mxu0 %v1863
    %1910 = vmatprep.subr.mxu0 0.0
    %1911 = vmatpush1.msra.mxu0 %v1862
    %1912 = vmatprep.subr.mxu0 0.0
    %1913 = vmatpush1.msra.mxu0 %v1861
    %1914 = vmatprep.subr.mxu0 0.0
    %1915 = vmatpush1.msra.mxu0 %v1860
    %1916 = vmatprep.subr.mxu0 0.0
    %1917 = vmatpush2.msra.mxu0 0.0
    %1918 = vmatprep.subr.mxu0 0.0
    %1919 = vmatpush2.msra.mxu0 0.0
    %1920 = vmatprep.subr.mxu0 0.0
    %1921 = vmatpush2.msra.mxu0 0.0
    %1922 = vmatprep.subr.mxu0 0.0
    %1923 = vmatpush2.msra.mxu0 0.0
    %1924 = vmatprep.subr.mxu0 0.0
    %1925 = vmatpush2.msra.mxu0 0.0
    %1926 = vmatprep.subr.mxu0 0.0
    %1927 = vmatpush2.msra.mxu0 0.0
    %1928 = vmatprep.subr.mxu0 0.0
    %1929 = vmatpush2.msra.mxu0 0.0
    %1930 = vmatprep.subr.mxu0 0.0
    %1931 = vmatpush2.msra.mxu0 0.0
    %1932 = vmatprep.subr.mxu0 0.0
    %1933 = vmatpush2.msra.mxu0 0.0
    %1934 = vmatprep.subr.mxu0 0.0
    %1935 = vmatpush2.msra.mxu0 0.0
    %1936 = vmatprep.subr.mxu0 0.0
    %1937 = vmatpush2.msra.mxu0 0.0
    %1938 = vmatprep.subr.mxu0 0.0
    %1939 = vmatpush2.msra.mxu0 0.0
    %1940 = vmatprep.subr.mxu0 0.0
    %1941 = vmatpush2.msra.mxu0 0.0
    %1942 = vmatprep.subr.mxu0 0.0
    %1943 = vmatpush2.msra.mxu0 0.0
    %1944 = vmatprep.subr.mxu0 0.0
    %1945 = vmatpush2.msra.mxu0 0.0
    %1946 = vmatprep.subr.mxu0 0.0
    %1947 = vmatpush2.msra.mxu0 0.0
    %1948 = vmatprep.mubr.f32.mxu0 0.0
    %1949 = vmatmul.mubr.f32.gmra.mxu0 %v572
    %v1950 = vpop.f32.mrf.mxu0
    %v1951 = vadd.f32 %v1882, %v1950
    %v1952 = vpop.f32.mrf.mxu0
    %1953 = vmatprep.mubr.f32.mxu0 0.0
    %1954 = vmatmul.mubr.f32.gmra.mxu0 %v575
    %v1955 = vpop.f32.mrf.mxu0
    %v1956 = vadd.f32 %v1882, %v1955
    %v1957 = vpop.f32.mrf.mxu0
    %1958 = vmatprep.mubr.f32.mxu0 0.0
    %1959 = vmatmul.mubr.f32.gmra.mxu0 %v578
    %v1960 = vpop.f32.mrf.mxu0
    %v1961 = vadd.f32 %v1882, %v1960
    %v1962 = vpop.f32.mrf.mxu0
    %1963 = vmatprep.mubr.f32.mxu0 0.0
    %1964 = vmatmul.mubr.f32.gmra.mxu0 %v581
    %v1965 = vpop.f32.mrf.mxu0
    %v1966 = vadd.f32 %v1882, %v1965
    %v1967 = vpop.f32.mrf.mxu0
    %1968 = vmatprep.mubr.f32.mxu0 0.0
    %1969 = vmatmul.mubr.f32.gmra.mxu0 %v584
    %v1970 = vpop.f32.mrf.mxu0
    %v1971 = vadd.f32 %v1882, %v1970
    %v1972 = vpop.f32.mrf.mxu0
    %1973 = vmatprep.mubr.f32.mxu0 0.0
    %1974 = vmatmul.mubr.f32.gmra.mxu0 %v587
    %v1975 = vpop.f32.mrf.mxu0
    %v1976 = vadd.f32 %v1882, %v1975
    %v1977 = vpop.f32.mrf.mxu0
    %1978 = vmatprep.mubr.f32.mxu0 0.0
    %1979 = vmatmul.mubr.f32.gmra.mxu0 %v590
    %v1980 = vpop.f32.mrf.mxu0
    %v1981 = vadd.f32 %v1882, %v1980
    %v1982 = vpop.f32.mrf.mxu0
    %1983 = vmatprep.mubr.f32.mxu0 0.0
    %1984 = vmatmul.mubr.f32.gmra.mxu0 %v593
    %v1985 = vpop.f32.mrf.mxu0
    %v1986 = vadd.f32 %v1882, %v1985
    %v1987 = vpop.f32.mrf.mxu0
    %1988 = vmatprep.mubr.f32.mxu0 0.0
    %1989 = vmatmul.mubr.f32.gmra.mxu0 %v596
    %v1990 = vpop.f32.mrf.mxu0
    %v1991 = vadd.f32 %v1882, %v1990
    %v1992 = vpop.f32.mrf.mxu0
    %1993 = vmatprep.mubr.f32.mxu0 0.0
    %1994 = vmatmul.mubr.f32.gmra.mxu0 %v599
    %v1995 = vpop.f32.mrf.mxu0
    %v1996 = vadd.f32 %v1882, %v1995
    %v1997 = vpop.f32.mrf.mxu0
    %1998 = vmatprep.mubr.f32.mxu0 0.0
    %1999 = vmatmul.mubr.f32.gmra.mxu0 %v602
    %v2000 = vpop.f32.mrf.mxu0
    %v2001 = vadd.f32 %v1882, %v2000
    %v2002 = vpop.f32.mrf.mxu0
    %2003 = vmatprep.mubr.f32.mxu0 0.0
    %2004 = vmatmul.mubr.f32.gmra.mxu0 %v605
    %v2005 = vpop.f32.mrf.mxu0
    %v2006 = vadd.f32 %v1882, %v2005
    %v2007 = vpop.f32.mrf.mxu0
    %2008 = vmatprep.mubr.f32.mxu0 0.0
    %2009 = vmatmul.mubr.f32.gmra.mxu0 %v608
    %v2010 = vpop.f32.mrf.mxu0
    %v2011 = vadd.f32 %v1882, %v2010
    %v2012 = vpop.f32.mrf.mxu0
    %2013 = vmatprep.mubr.f32.mxu0 0.0
    %2014 = vmatmul.mubr.f32.gmra.mxu0 %v611
    %v2015 = vpop.f32.mrf.mxu0
    %v2016 = vadd.f32 %v1882, %v2015
    %v2017 = vpop.f32.mrf.mxu0
    %2018 = vmatprep.mubr.f32.mxu0 0.0
    %2019 = vmatmul.mubr.f32.gmra.mxu0 %v614
    %v2020 = vpop.f32.mrf.mxu0
    %v2021 = vadd.f32 %v1882, %v2020
    %v2022 = vpop.f32.mrf.mxu0
    %2023 = vmatprep.mubr.f32.mxu0 0.0
    %2024 = vmatmul.mubr.f32.gmra.mxu0 %v617
    %v2025 = vpop.f32.mrf.mxu0
    %v2026 = vadd.f32 %v1882, %v2025
    %v2027 = vpop.f32.mrf.mxu0
    %2028 = vdwg.mxu0
    %vm2029 = vcmp.gt.f32.partialorder %v1951, 0.0
    %vm2030 = vcmp.gt.f32.partialorder %v1956, 0.0
    %vm2031 = vcmp.gt.f32.partialorder %v1961, 0.0
    %vm2032 = vcmp.gt.f32.partialorder %v1966, 0.0
    %vm2033 = vcmp.gt.f32.partialorder %v1971, 0.0
    %vm2034 = vcmp.gt.f32.partialorder %v1976, 0.0
    %vm2035 = vcmp.gt.f32.partialorder %v1981, 0.0
    %vm2036 = vcmp.gt.f32.partialorder %v1986, 0.0
    %vm2037 = vcmp.gt.f32.partialorder %v1991, 0.0
    %vm2038 = vcmp.gt.f32.partialorder %v1996, 0.0
    %vm2039 = vcmp.gt.f32.partialorder %v2001, 0.0
    %vm2040 = vcmp.gt.f32.partialorder %v2006, 0.0
    %vm2041 = vcmp.gt.f32.partialorder %v2011, 0.0
    %vm2042 = vcmp.gt.f32.partialorder %v2016, 0.0
    %vm2043 = vcmp.gt.f32.partialorder %v2021, 0.0
    %vm2044 = vcmp.gt.f32.partialorder %v2026, 0.0
    %v2045 = vmul.f32 %v1951, 0.01
    %v2046 = vmul.f32 %v1956, 0.01
    %v2047 = vmul.f32 %v1961, 0.01
    %v2048 = vmul.f32 %v1966, 0.01
    %v2049 = vmul.f32 %v1971, 0.01
    %v2050 = vmul.f32 %v1976, 0.01
    %v2051 = vmul.f32 %v1981, 0.01
    %v2052 = vmul.f32 %v1986, 0.01
    %v2053 = vmul.f32 %v1991, 0.01
    %v2054 = vmul.f32 %v1996, 0.01
    %v2055 = vmul.f32 %v2001, 0.01
    %v2056 = vmul.f32 %v2006, 0.01
    %v2057 = vmul.f32 %v2011, 0.01
    %v2058 = vmul.f32 %v2016, 0.01
    %v2059 = vmul.f32 %v2021, 0.01
    %v2060 = vmul.f32 %v2026, 0.01
    %v2061 = vsel %vm2029, %v1951, %v2045
    %v2062 = vsel %vm2030, %v1956, %v2046
    %v2063 = vsel %vm2031, %v1961, %v2047
    %v2064 = vsel %vm2032, %v1966, %v2048
    %v2065 = vsel %vm2033, %v1971, %v2049
    %v2066 = vsel %vm2034, %v1976, %v2050
    %v2067 = vsel %vm2035, %v1981, %v2051
    %v2068 = vsel %vm2036, %v1986, %v2052
    %v2069 = vsel %vm2037, %v1991, %v2053
    %v2070 = vsel %vm2038, %v1996, %v2054
    %v2071 = vsel %vm2039, %v2001, %v2055
    %v2072 = vsel %vm2040, %v2006, %v2056
    %v2073 = vsel %vm2041, %v2011, %v2057
    %v2074 = vsel %vm2042, %v2016, %v2058
    %v2075 = vsel %vm2043, %v2021, %v2059
    %v2076 = vsel %vm2044, %v2026, %v2060
    %s2077 = scalar_lea.vmem [#allocation6], 256
    %v2078 = vld [vmem:[%s2077] sm:$0xff]
    %v2079 = vld [vmem:[%s2077 + $0x8] sm:$0xff]
    %v2080 = vld [vmem:[%s2077 + $0x10] sm:$0xff]
    %v2081 = vld [vmem:[%s2077 + $0x18] sm:$0xff]
    %v2082 = vld [vmem:[%s2077 + $0x20] sm:$0xff]
    %v2083 = vld [vmem:[%s2077 + $0x28] sm:$0xff]
    %v2084 = vld [vmem:[%s2077 + $0x30] sm:$0xff]
    %v2085 = vld [vmem:[%s2077 + $0x38] sm:$0xff]
    %v2086 = vld [vmem:[%s2077 + $0x40] sm:$0xff]
    %v2087 = vld [vmem:[%s2077 + $0x48] sm:$0xff]
    %v2088 = vld [vmem:[%s2077 + $0x50] sm:$0xff]
    %v2089 = vld [vmem:[%s2077 + $0x58] sm:$0xff]
    %v2090 = vld [vmem:[%s2077 + $0x60] sm:$0xff]
    %v2091 = vld [vmem:[%s2077 + $0x68] sm:$0xff]
    %v2092 = vld [vmem:[%s2077 + $0x70] sm:$0xff]
    %v2093 = vld [vmem:[%s2077 + $0x78] sm:$0xff]
    %s2094 = scalar_lea.vmem %s6, 2
    %v2095 = vld [vmem:[%s2094] sm:$0x1]
    %v2097 = vlaneseq
    %v2098 = vshrl.u32 %v2097, 7
    %v2099 = vsub.s32 0, %v2098
    %v2100 = vrot.slane %v2095, %v2099
    %2102 = vmatprep.subr.mxu0 0.0
    %2103 = vmatpush1.msra.mxu0 %v2093
    %2104 = vmatprep.subr.mxu0 0.0
    %2105 = vmatpush1.msra.mxu0 %v2092
    %2106 = vmatprep.subr.mxu0 0.0
    %2107 = vmatpush1.msra.mxu0 %v2091
    %2108 = vmatprep.subr.mxu0 0.0
    %2109 = vmatpush1.msra.mxu0 %v2090
    %2110 = vmatprep.subr.mxu0 0.0
    %2111 = vmatpush1.msra.mxu0 %v2089
    %2112 = vmatprep.subr.mxu0 0.0
    %2113 = vmatpush1.msra.mxu0 %v2088
    %2114 = vmatprep.subr.mxu0 0.0
    %2115 = vmatpush1.msra.mxu0 %v2087
    %2116 = vmatprep.subr.mxu0 0.0
    %2117 = vmatpush1.msra.mxu0 %v2086
    %2118 = vmatprep.subr.mxu0 0.0
    %2119 = vmatpush1.msra.mxu0 %v2085
    %2120 = vmatprep.subr.mxu0 0.0
    %2121 = vmatpush1.msra.mxu0 %v2084
    %2122 = vmatprep.subr.mxu0 0.0
    %2123 = vmatpush1.msra.mxu0 %v2083
    %2124 = vmatprep.subr.mxu0 0.0
    %2125 = vmatpush1.msra.mxu0 %v2082
    %2126 = vmatprep.subr.mxu0 0.0
    %2127 = vmatpush1.msra.mxu0 %v2081
    %2128 = vmatprep.subr.mxu0 0.0
    %2129 = vmatpush1.msra.mxu0 %v2080
    %2130 = vmatprep.subr.mxu0 0.0
    %2131 = vmatpush1.msra.mxu0 %v2079
    %2132 = vmatprep.subr.mxu0 0.0
    %2133 = vmatpush1.msra.mxu0 %v2078
    %2134 = vmatprep.subr.mxu0 0.0
    %2135 = vmatpush2.msra.mxu0 0.0
    %2136 = vmatprep.subr.mxu0 0.0
    %2137 = vmatpush2.msra.mxu0 0.0
    %2138 = vmatprep.subr.mxu0 0.0
    %2139 = vmatpush2.msra.mxu0 0.0
    %2140 = vmatprep.subr.mxu0 0.0
    %2141 = vmatpush2.msra.mxu0 0.0
    %2142 = vmatprep.subr.mxu0 0.0
    %2143 = vmatpush2.msra.mxu0 0.0
    %2144 = vmatprep.subr.mxu0 0.0
    %2145 = vmatpush2.msra.mxu0 0.0
    %2146 = vmatprep.subr.mxu0 0.0
    %2147 = vmatpush2.msra.mxu0 0.0
    %2148 = vmatprep.subr.mxu0 0.0
    %2149 = vmatpush2.msra.mxu0 0.0
    %2150 = vmatprep.subr.mxu0 0.0
    %2151 = vmatpush2.msra.mxu0 0.0
    %2152 = vmatprep.subr.mxu0 0.0
    %2153 = vmatpush2.msra.mxu0 0.0
    %2154 = vmatprep.subr.mxu0 0.0
    %2155 = vmatpush2.msra.mxu0 0.0
    %2156 = vmatprep.subr.mxu0 0.0
    %2157 = vmatpush2.msra.mxu0 0.0
    %2158 = vmatprep.subr.mxu0 0.0
    %2159 = vmatpush2.msra.mxu0 0.0
    %2160 = vmatprep.subr.mxu0 0.0
    %2161 = vmatpush2.msra.mxu0 0.0
    %2162 = vmatprep.subr.mxu0 0.0
    %2163 = vmatpush2.msra.mxu0 0.0
    %2164 = vmatprep.subr.mxu0 0.0
    %2165 = vmatpush2.msra.mxu0 0.0
    %2166 = vmatprep.mubr.f32.mxu0 0.0
    %2167 = vmatmul.mubr.f32.gmra.mxu0 %v2061
    %v2168 = vpop.f32.mrf.mxu0
    %v2169 = vadd.f32 %v2100, %v2168
    %v2170 = vpop.f32.mrf.mxu0
    %2171 = vmatprep.mubr.f32.mxu0 0.0
    %2172 = vmatmul.mubr.f32.gmra.mxu0 %v2062
    %v2173 = vpop.f32.mrf.mxu0
    %v2174 = vadd.f32 %v2100, %v2173
    %v2175 = vpop.f32.mrf.mxu0
    %2176 = vmatprep.mubr.f32.mxu0 0.0
    %2177 = vmatmul.mubr.f32.gmra.mxu0 %v2063
    %v2178 = vpop.f32.mrf.mxu0
    %v2179 = vadd.f32 %v2100, %v2178
    %v2180 = vpop.f32.mrf.mxu0
    %2181 = vmatprep.mubr.f32.mxu0 0.0
    %2182 = vmatmul.mubr.f32.gmra.mxu0 %v2064
    %v2183 = vpop.f32.mrf.mxu0
    %v2184 = vadd.f32 %v2100, %v2183
    %v2185 = vpop.f32.mrf.mxu0
    %2186 = vmatprep.mubr.f32.mxu0 0.0
    %2187 = vmatmul.mubr.f32.gmra.mxu0 %v2065
    %v2188 = vpop.f32.mrf.mxu0
    %v2189 = vadd.f32 %v2100, %v2188
    %v2190 = vpop.f32.mrf.mxu0
    %2191 = vmatprep.mubr.f32.mxu0 0.0
    %2192 = vmatmul.mubr.f32.gmra.mxu0 %v2066
    %v2193 = vpop.f32.mrf.mxu0
    %v2194 = vadd.f32 %v2100, %v2193
    %v2195 = vpop.f32.mrf.mxu0
    %2196 = vmatprep.mubr.f32.mxu0 0.0
    %2197 = vmatmul.mubr.f32.gmra.mxu0 %v2067
    %v2198 = vpop.f32.mrf.mxu0
    %v2199 = vadd.f32 %v2100, %v2198
    %v2200 = vpop.f32.mrf.mxu0
    %2201 = vmatprep.mubr.f32.mxu0 0.0
    %2202 = vmatmul.mubr.f32.gmra.mxu0 %v2068
    %v2203 = vpop.f32.mrf.mxu0
    %v2204 = vadd.f32 %v2100, %v2203
    %v2205 = vpop.f32.mrf.mxu0
    %2206 = vmatprep.mubr.f32.mxu0 0.0
    %2207 = vmatmul.mubr.f32.gmra.mxu0 %v2069
    %v2208 = vpop.f32.mrf.mxu0
    %v2209 = vadd.f32 %v2100, %v2208
    %v2210 = vpop.f32.mrf.mxu0
    %2211 = vmatprep.mubr.f32.mxu0 0.0
    %2212 = vmatmul.mubr.f32.gmra.mxu0 %v2070
    %v2213 = vpop.f32.mrf.mxu0
    %v2214 = vadd.f32 %v2100, %v2213
    %v2215 = vpop.f32.mrf.mxu0
    %2216 = vmatprep.mubr.f32.mxu0 0.0
    %2217 = vmatmul.mubr.f32.gmra.mxu0 %v2071
    %v2218 = vpop.f32.mrf.mxu0
    %v2219 = vadd.f32 %v2100, %v2218
    %v2220 = vpop.f32.mrf.mxu0
    %2221 = vmatprep.mubr.f32.mxu0 0.0
    %2222 = vmatmul.mubr.f32.gmra.mxu0 %v2072
    %v2223 = vpop.f32.mrf.mxu0
    %v2224 = vadd.f32 %v2100, %v2223
    %v2225 = vpop.f32.mrf.mxu0
    %2226 = vmatprep.mubr.f32.mxu0 0.0
    %2227 = vmatmul.mubr.f32.gmra.mxu0 %v2073
    %v2228 = vpop.f32.mrf.mxu0
    %v2229 = vadd.f32 %v2100, %v2228
    %v2230 = vpop.f32.mrf.mxu0
    %2231 = vmatprep.mubr.f32.mxu0 0.0
    %2232 = vmatmul.mubr.f32.gmra.mxu0 %v2074
    %v2233 = vpop.f32.mrf.mxu0
    %v2234 = vadd.f32 %v2100, %v2233
    %v2235 = vpop.f32.mrf.mxu0
    %2236 = vmatprep.mubr.f32.mxu0 0.0
    %2237 = vmatmul.mubr.f32.gmra.mxu0 %v2075
    %v2238 = vpop.f32.mrf.mxu0
    %v2239 = vadd.f32 %v2100, %v2238
    %v2240 = vpop.f32.mrf.mxu0
    %2241 = vmatprep.mubr.f32.mxu0 0.0
    %2242 = vmatmul.mubr.f32.gmra.mxu0 %v2076
    %v2243 = vpop.f32.mrf.mxu0
    %v2244 = vadd.f32 %v2100, %v2243
    %v2245 = vpop.f32.mrf.mxu0
    %2246 = vdwg.mxu0
    %vm2247 = vcmp.gt.f32.partialorder %v2169, 0.0
    %vm2248 = vcmp.gt.f32.partialorder %v2174, 0.0
    %vm2249 = vcmp.gt.f32.partialorder %v2179, 0.0
    %vm2250 = vcmp.gt.f32.partialorder %v2184, 0.0
    %vm2251 = vcmp.gt.f32.partialorder %v2189, 0.0
    %vm2252 = vcmp.gt.f32.partialorder %v2194, 0.0
    %vm2253 = vcmp.gt.f32.partialorder %v2199, 0.0
    %vm2254 = vcmp.gt.f32.partialorder %v2204, 0.0
    %vm2255 = vcmp.gt.f32.partialorder %v2209, 0.0
    %vm2256 = vcmp.gt.f32.partialorder %v2214, 0.0
    %vm2257 = vcmp.gt.f32.partialorder %v2219, 0.0
    %vm2258 = vcmp.gt.f32.partialorder %v2224, 0.0
    %vm2259 = vcmp.gt.f32.partialorder %v2229, 0.0
    %vm2260 = vcmp.gt.f32.partialorder %v2234, 0.0
    %vm2261 = vcmp.gt.f32.partialorder %v2239, 0.0
    %vm2262 = vcmp.gt.f32.partialorder %v2244, 0.0
    %v2263 = vmul.f32 %v2169, 0.01
    %v2264 = vmul.f32 %v2174, 0.01
    %v2265 = vmul.f32 %v2179, 0.01
    %v2266 = vmul.f32 %v2184, 0.01
    %v2267 = vmul.f32 %v2189, 0.01
    %v2268 = vmul.f32 %v2194, 0.01
    %v2269 = vmul.f32 %v2199, 0.01
    %v2270 = vmul.f32 %v2204, 0.01
    %v2271 = vmul.f32 %v2209, 0.01
    %v2272 = vmul.f32 %v2214, 0.01
    %v2273 = vmul.f32 %v2219, 0.01
    %v2274 = vmul.f32 %v2224, 0.01
    %v2275 = vmul.f32 %v2229, 0.01
    %v2276 = vmul.f32 %v2234, 0.01
    %v2277 = vmul.f32 %v2239, 0.01
    %v2278 = vmul.f32 %v2244, 0.01
    %v2279 = vsel %vm2247, %v2169, %v2263
    %v2280 = vsel %vm2248, %v2174, %v2264
    %v2281 = vsel %vm2249, %v2179, %v2265
    %v2282 = vsel %vm2250, %v2184, %v2266
    %v2283 = vsel %vm2251, %v2189, %v2267
    %v2284 = vsel %vm2252, %v2194, %v2268
    %v2285 = vsel %vm2253, %v2199, %v2269
    %v2286 = vsel %vm2254, %v2204, %v2270
    %v2287 = vsel %vm2255, %v2209, %v2271
    %v2288 = vsel %vm2256, %v2214, %v2272
    %v2289 = vsel %vm2257, %v2219, %v2273
    %v2290 = vsel %vm2258, %v2224, %v2274
    %v2291 = vsel %vm2259, %v2229, %v2275
    %v2292 = vsel %vm2260, %v2234, %v2276
    %v2293 = vsel %vm2261, %v2239, %v2277
    %v2294 = vsel %vm2262, %v2244, %v2278
    %s2295 = scalar_lea.vmem %s7, 2
    %v2296 = vld [vmem:[%s2295] sm:$0x1]
    %v2298 = vlaneseq
    %v2299 = vshrl.u32 %v2298, 7
    %v2300 = vsub.s32 0, %v2299
    %v2301 = vrot.slane %v2296, %v2300
    %v2303 = vmul.f32 %v2279, %v2301
    %v2304 = vmul.f32 %v2280, %v2301
    %v2305 = vmul.f32 %v2281, %v2301
    %v2306 = vmul.f32 %v2282, %v2301
    %v2307 = vmul.f32 %v2283, %v2301
    %v2308 = vmul.f32 %v2284, %v2301
    %v2309 = vmul.f32 %v2285, %v2301
    %v2310 = vmul.f32 %v2286, %v2301
    %v2311 = vmul.f32 %v2287, %v2301
    %v2312 = vmul.f32 %v2288, %v2301
    %v2313 = vmul.f32 %v2289, %v2301
    %v2314 = vmul.f32 %v2290, %v2301
    %v2315 = vmul.f32 %v2291, %v2301
    %v2316 = vmul.f32 %v2292, %v2301
    %v2317 = vmul.f32 %v2293, %v2301
    %v2318 = vmul.f32 %v2294, %v2301
    %2319 = vadd.xlane.f32.xlu0 %v2303
    %v2320 = vpop.xlane.xlu0 %2319
    %2321 = vadd.xlane.f32.xlu0 %v2304
    %v2322 = vpop.xlane.xlu0 %2321
    %2323 = vadd.xlane.f32.xlu0 %v2305
    %v2324 = vpop.xlane.xlu0 %2323
    %2325 = vadd.xlane.f32.xlu0 %v2306
    %v2326 = vpop.xlane.xlu0 %2325
    %2327 = vadd.xlane.f32.xlu0 %v2307
    %v2328 = vpop.xlane.xlu0 %2327
    %2329 = vadd.xlane.f32.xlu0 %v2308
    %v2330 = vpop.xlane.xlu0 %2329
    %2331 = vadd.xlane.f32.xlu0 %v2309
    %v2332 = vpop.xlane.xlu0 %2331
    %2333 = vadd.xlane.f32.xlu0 %v2310
    %v2334 = vpop.xlane.xlu0 %2333
    %2335 = vadd.xlane.f32.xlu0 %v2311
    %v2336 = vpop.xlane.xlu0 %2335
    %2337 = vadd.xlane.f32.xlu0 %v2312
    %v2338 = vpop.xlane.xlu0 %2337
    %2339 = vadd.xlane.f32.xlu0 %v2313
    %v2340 = vpop.xlane.xlu0 %2339
    %2341 = vadd.xlane.f32.xlu0 %v2314
    %v2342 = vpop.xlane.xlu0 %2341
    %2343 = vadd.xlane.f32.xlu0 %v2315
    %v2344 = vpop.xlane.xlu0 %2343
    %2345 = vadd.xlane.f32.xlu0 %v2316
    %v2346 = vpop.xlane.xlu0 %2345
    %2347 = vadd.xlane.f32.xlu0 %v2317
    %v2348 = vpop.xlane.xlu0 %2347
    %2349 = vadd.xlane.f32.xlu0 %v2318
    %v2350 = vpop.xlane.xlu0 %2349
    %s2351 = sld [smem:[#allocation8 + $0x2]]
    %v2352 = vstv %s2351
    %v2353 = vadd.f32 %v2320, %v2352
    %v2354 = vadd.f32 %v2322, %v2352
    %v2355 = vadd.f32 %v2324, %v2352
    %v2356 = vadd.f32 %v2326, %v2352
    %v2357 = vadd.f32 %v2328, %v2352
    %v2358 = vadd.f32 %v2330, %v2352
    %v2359 = vadd.f32 %v2332, %v2352
    %v2360 = vadd.f32 %v2334, %v2352
    %v2361 = vadd.f32 %v2336, %v2352
    %v2362 = vadd.f32 %v2338, %v2352
    %v2363 = vadd.f32 %v2340, %v2352
    %v2364 = vadd.f32 %v2342, %v2352
    %v2365 = vadd.f32 %v2344, %v2352
    %v2366 = vadd.f32 %v2346, %v2352
    %v2367 = vadd.f32 %v2348, %v2352
    %v2368 = vadd.f32 %v2350, %v2352
    %v2385 = vlaneseq
    %v2386 = vshrl.u32 %v2385, 7
    %v2387 = vsub.s32 %v1140, %v2386
    %v2388 = vrot.slane %v2353, %v2387
    %v2389 = vlaneseq
    %v2390 = vshrl.u32 %v2389, 7
    %v2391 = vsub.s32 %v1145, %v2390
    %v2392 = vrot.slane %v2354, %v2391
    %v2393 = vsel %vm1150, %v2392, %v2388
    %v2394 = vlaneseq
    %v2395 = vshrl.u32 %v2394, 7
    %v2396 = vsub.s32 %v1152, %v2395
    %v2397 = vrot.slane %v2355, %v2396
    %v2398 = vsel %vm1157, %v2397, %v2393
    %v2399 = vlaneseq
    %v2400 = vshrl.u32 %v2399, 7
    %v2401 = vsub.s32 %v1159, %v2400
    %v2402 = vrot.slane %v2356, %v2401
    %v2403 = vsel %vm1164, %v2402, %v2398
    %v2404 = vlaneseq
    %v2405 = vshrl.u32 %v2404, 7
    %v2406 = vsub.s32 %v1166, %v2405
    %v2407 = vrot.slane %v2357, %v2406
    %v2408 = vsel %vm1171, %v2407, %v2403
    %v2409 = vlaneseq
    %v2410 = vshrl.u32 %v2409, 7
    %v2411 = vsub.s32 %v1173, %v2410
    %v2412 = vrot.slane %v2358, %v2411
    %v2413 = vsel %vm1178, %v2412, %v2408
    %v2414 = vlaneseq
    %v2415 = vshrl.u32 %v2414, 7
    %v2416 = vsub.s32 %v1180, %v2415
    %v2417 = vrot.slane %v2359, %v2416
    %v2418 = vsel %vm1185, %v2417, %v2413
    %v2419 = vlaneseq
    %v2420 = vshrl.u32 %v2419, 7
    %v2421 = vsub.s32 %v1187, %v2420
    %v2422 = vrot.slane %v2360, %v2421
    %v2423 = vsel %vm1192, %v2422, %v2418
    %v2424 = vlaneseq
    %v2425 = vshrl.u32 %v2424, 7
    %v2426 = vsub.s32 %v1194, %v2425
    %v2427 = vrot.slane %v2361, %v2426
    %v2428 = vsel %vm1199, %v2427, %v2423
    %v2429 = vlaneseq
    %v2430 = vshrl.u32 %v2429, 7
    %v2431 = vsub.s32 %v1201, %v2430
    %v2432 = vrot.slane %v2362, %v2431
    %v2433 = vsel %vm1206, %v2432, %v2428
    %v2434 = vlaneseq
    %v2435 = vshrl.u32 %v2434, 7
    %v2436 = vsub.s32 %v1208, %v2435
    %v2437 = vrot.slane %v2363, %v2436
    %v2438 = vsel %vm1213, %v2437, %v2433
    %v2439 = vlaneseq
    %v2440 = vshrl.u32 %v2439, 7
    %v2441 = vsub.s32 %v1215, %v2440
    %v2442 = vrot.slane %v2364, %v2441
    %v2443 = vsel %vm1220, %v2442, %v2438
    %v2444 = vlaneseq
    %v2445 = vshrl.u32 %v2444, 7
    %v2446 = vsub.s32 %v1222, %v2445
    %v2447 = vrot.slane %v2365, %v2446
    %v2448 = vsel %vm1227, %v2447, %v2443
    %v2449 = vlaneseq
    %v2450 = vshrl.u32 %v2449, 7
    %v2451 = vsub.s32 %v1229, %v2450
    %v2452 = vrot.slane %v2366, %v2451
    %v2453 = vsel %vm1234, %v2452, %v2448
    %v2454 = vlaneseq
    %v2455 = vshrl.u32 %v2454, 7
    %v2456 = vsub.s32 %v1236, %v2455
    %v2457 = vrot.slane %v2367, %v2456
    %v2458 = vsel %vm1241, %v2457, %v2453
    %v2459 = vlaneseq
    %v2460 = vshrl.u32 %v2459, 7
    %v2461 = vsub.s32 %v1243, %v2460
    %v2462 = vrot.slane %v2368, %v2461
    %v2463 = vsel %vm1248, %v2462, %v2458
    %2465 = vst [vmem:[#allocation9 + $0x2] sm:$0x1] %v2463
    // Predicated region
    $region50: #{tpu_custom_call.1} parent=1 // pred_check
      _
    $region51: #{tpu_custom_call.1} parent=1 // pred_check_branch
      %2467 = sbr.rel (0) target = $region53
    $region52: #{tpu_custom_call.1} parent=1 // pred_region
      %s2469 = ssub.s32 64, 64
      %2470 = vsyncadd [#allocation4], %s2469
      %s2472 = sshll.u32 [#allocation9], 4
      %s2473 = int_to_ptr.vmem [resolvable:$true] %s2472
      %2475 = dma.vmem_to_hbm [thread:$0]  %s2473, 64, %s9, [#allocation4]
    $region53: #{tpu_custom_call.1} parent=1 // pred_fallthru
      _
    // Predicated region
    $region54: #{tpu_custom_call.1} parent=1 // pred_check
      _
    $region55: #{tpu_custom_call.1} parent=1 // pred_check_branch
      %2477 = sbr.rel (0) target = $region57
    $region56: #{tpu_custom_call.1} parent=1 // pred_region
      %2478 = dma.done [#allocation4], 64
    $region57: #{tpu_custom_call.1} parent=1 // pred_fallthru
      _
    %2479 = vsyncpa [#allocation3], 1
    %2480 = vsyncpa [#allocation7], 1
    %2481 = vsyncpa [#allocation4], 1
    %2482 = vsyncpa [#allocation5], 1

</llo_original>
